<compile_context>
chip_gen: v7x
topology: tpu7x:2x2x1
jax: 0.10.0
libtpu: 0.0.40
codegen_flags: <defaults>
</compile_context>

<pallas_src>
import jax
import jax.numpy as jnp
import numpy as np
from jax.experimental import pallas as pl
from jax.experimental.pallas import tpu as pltpu


# ---------------------------------------------------------------------------
# The fused LeNet kernel
# ---------------------------------------------------------------------------
def lenet_kernel(xr_ref, t1_ref, c1b_ref, t2_ref, c2b_ref,
                 wd1_ref, bd1_ref, wd2_ref, bd2_ref, wd3_ref, bd3_ref,
                 out_ref, a1_ref, a2_ref, feat_ref):
    B = out_ref.shape[0]

    # -------- conv1: build shift-folded im2col matrix A1 (2*B*12, 5*128) ----
    # A1[p*(B*12)+b*12+s*6+t, kh*128+v] = x[b, 4t+2s+p+kh, v]
    #   (conv1 output row oh = 2i+p with pooled row i = 2t+s)
    # Padding lanes [28,128) of each kh block must be zero (matching zero rows
    # of t1), so zero-init the scratch first.
    a1_ref[...] = jnp.zeros_like(a1_ref)
    for p in range(2):
        for b in range(B):
            for s in range(2):
                r0 = p * (B * 12) + b * 12 + s * 6
                for kh in range(5):
                    off = 2 * s + p + kh          # in [0, 7]
                    a1_ref[r0:r0 + 6, kh * 128:kh * 128 + 28] = (
                        xr_ref[off % 4, b, off // 4:off // 4 + 6, :])

    # conv1 matmul + bias + relu.  Columns: q*128 + co*12 + j  (ow = 2j+q).
    h1 = jnp.dot(a1_ref[...], t1_ref[...], preferred_element_type=jnp.float32)
    h1 = jnp.maximum(h1 + c1b_ref[...], 0.0)            # (2*B*12, 256)
    # fused 2x2 max-pool: rows (over p) then cols (over q) - contiguous halves
    m1 = jnp.maximum(h1[:B * 12, :], h1[B * 12:, :])    # (B*12, 256)
    p1 = jnp.maximum(m1[:, :128], m1[:, 128:])          # (B*12, 128); cols>=72 are 0
    # p1[b*12 + (i%2)*6 + i//2, ci*12 + j] = pooled1[b, ci, i, j]

    # -------- conv2: build A2 (2*B*4, 5*128) ---------------------------------
    # A2[p2*(B*4)+b*4+i2, kh*128 + (ci*12+v)] = pooled1[b, ci, 2*i2+p2+kh, v]
    # Every element of A2 is written by the full-width (128-lane) row copies.
    for p2 in range(2):
        for b in range(B):
            d0 = p2 * (B * 4) + b * 4
            for kh in range(5):
                r = p2 + kh                              # in [0, 5]
                s0 = b * 12 + (r % 2) * 6 + r // 2
                a2_ref[d0:d0 + 4, kh * 128:(kh + 1) * 128] = p1[s0:s0 + 4, :]

    h2 = jnp.dot(a2_ref[...], t2_ref[...], preferred_element_type=jnp.float32)
    h2 = jnp.maximum(h2 + c2b_ref[...], 0.0)            # (2*B*4, 256)
    m2 = jnp.maximum(h2[:B * 4, :], h2[B * 4:, :])      # (B*4, 256)
    p2v = jnp.maximum(m2[:, :128], m2[:, 128:])         # (B*4, 128); cols>=64 are 0
    # p2v[b*4+i2, co*4+j2] = pooled2[b, co, i2, j2]

    # -------- flatten into (B, 4*128); dense1 weights are pre-permuted/padded
    for b in range(B):
        for i2 in range(4):
            feat_ref[b:b + 1, i2 * 128:(i2 + 1) * 128] = (
                p2v[b * 4 + i2:b * 4 + i2 + 1, :])

    # -------- fused dense stack: 256 -> 120 -> 84 -> 2 (relu on all, per spec)
    y = jnp.maximum(
        jnp.dot(feat_ref[...], wd1_ref[...],
                preferred_element_type=jnp.float32) + bd1_ref[...], 0.0)
    y = jnp.maximum(
        jnp.dot(y, wd2_ref[...],
                preferred_element_type=jnp.float32) + bd2_ref[...], 0.0)
    y = jnp.maximum(
        jnp.dot(y, wd3_ref[...],
                preferred_element_type=jnp.float32) + bd3_ref[...], 0.0)
    out_ref[...] = y


# ---------------------------------------------------------------------------
# Wrapper: one pallas_call, whole arrays resident in VMEM
# ---------------------------------------------------------------------------
def lenet_forward(x, kp):
    """x: (B, 1, 28, 28) float32 NCHW (same as the torch module)."""
    B = x.shape[0]
    # One-time tiny rearrangement of the input: rows grouped by (row mod 4),
    # so every in-kernel im2col copy is a contiguous block read.
    xr = x[:, 0, :, :].reshape(B, 7, 4, 28).transpose(2, 0, 1, 3)  # (4,B,7,28)

    vmem = pl.BlockSpec(memory_space=pltpu.MemorySpace.VMEM)
    return pl.pallas_call(
        lenet_kernel,
        out_shape=jax.ShapeDtypeStruct((B, 2), jnp.float32),
        in_specs=[vmem] * 11,
        out_specs=vmem,
        scratch_shapes=[
            pltpu.VMEM((2 * B * 12, 5 * 128), jnp.float32),  # A1 (conv1 im2col)
            pltpu.VMEM((2 * B * 4, 5 * 128), jnp.float32),   # A2 (conv2 im2col)
            pltpu.VMEM((B, 4 * 128), jnp.float32),           # flattened features
        ],
    )(xr, kp["t1"], kp["c1b"], kp["t2"], kp["c2b"],
      kp["wd1"], kp["bd1"], kp["wd2"], kp["bd2"], kp["wd3"], kp["bd3"])


# ---------------------------------------------------------------------------
# Parameters: PyTorch-style init, then one-time transform to kernel layout
# ---------------------------------------------------------------------------
def init_params(key):
    def uinit(k, shape, fan_in):
        bound = 1.0 / jnp.sqrt(float(fan_in))
        return jax.random.uniform(k, shape, jnp.float32, -bound, bound)

    ks = jax.random.split(key, 10)
    p = {}
    p["conv1_w"] = uinit(ks[0], (6, 1, 5, 5), 1 * 5 * 5)
    p["conv1_b"] = uinit(ks[1], (6,), 1 * 5 * 5)
    p["conv2_w"] = uinit(ks[2], (16, 6, 5, 5), 6 * 5 * 5)
    p["conv2_b"] = uinit(ks[3], (16,), 6 * 5 * 5)
    p["dense1_w"] = uinit(ks[4], (120, 256), 256)
    p["dense1_b"] = uinit(ks[5], (120,), 256)
    p["dense2_w"] = uinit(ks[6], (84, 120), 120)
    p["dense2_b"] = uinit(ks[7], (84,), 120)
    p["dense3_w"] = uinit(ks[8], (2, 84), 84)
    p["dense3_b"] = uinit(ks[9], (2,), 84)
    return p


def prepare_params(p):
    """One-time (init-time) transform of torch-layout weights into the
    shift-folded, 128-lane-padded matrices the fused kernel consumes."""
    w1 = np.asarray(p["conv1_w"], np.float32)    # (6,1,5,5)
    b1 = np.asarray(p["conv1_b"], np.float32)
    w2 = np.asarray(p["conv2_w"], np.float32)    # (16,6,5,5)
    b2 = np.asarray(p["conv2_b"], np.float32)

    # conv1: T1[kh*128+v, q*128+co*12+j] = w1[co,0,kh, v-(2j+q)] on the band.
    T1 = np.zeros((5 * 128, 2 * 128), np.float32)
    bias1 = np.zeros((1, 2 * 128), np.float32)
    j = np.arange(12)
    for kh in range(5):
        for kw in range(5):
            for q in range(2):
                rows = kh * 128 + 2 * j + q + kw
                for co in range(6):
                    T1[rows, q * 128 + co * 12 + j] = w1[co, 0, kh, kw]
    for q in range(2):
        for co in range(6):
            bias1[0, q * 128 + co * 12:q * 128 + (co + 1) * 12] = b1[co]

    # conv2: T2[kh*128+ci*12+v, q*128+co*4+j2] = w2[co,ci,kh, v-(2j2+q)].
    T2 = np.zeros((5 * 128, 2 * 128), np.float32)
    bias2 = np.zeros((1, 2 * 128), np.float32)
    j2 = np.arange(4)
    for kh in range(5):
        for ci in range(6):
            for kw in range(5):
                for q in range(2):
                    rows = kh * 128 + ci * 12 + 2 * j2 + q + kw
                    for co in range(16):
                        T2[rows, q * 128 + co * 4 + j2] = w2[co, ci, kh, kw]
    for q in range(2):
        for co in range(16):
            bias2[0, q * 128 + co * 4:q * 128 + (co + 1) * 4] = b2[co]

    # dense1: permute torch flatten order (co,i2,j2) -> kernel order
    # (i2*128 + co*4 + j2), pad unused rows with zeros; pre-transpose to (K,N).
    wd1 = np.asarray(p["dense1_w"], np.float32)  # (120, 256)
    W1p = np.zeros((4 * 128, 120), np.float32)
    for i2 in range(4):
        for co in range(16):
            for jj in range(4):
                W1p[i2 * 128 + co * 4 + jj, :] = wd1[:, co * 16 + i2 * 4 + jj]
    bd1 = np.asarray(p["dense1_b"], np.float32).reshape(1, 120)
    W2p = np.asarray(p["dense2_w"], np.float32).T.copy()   # (120, 84)
    bd2 = np.asarray(p["dense2_b"], np.float32).reshape(1, 84)
    W3p = np.asarray(p["dense3_w"], np.float32).T.copy()   # (84, 2)
    bd3 = np.asarray(p["dense3_b"], np.float32).reshape(1, 2)

    return {"t1": jnp.asarray(T1), "c1b": jnp.asarray(bias1),
            "t2": jnp.asarray(T2), "c2b": jnp.asarray(bias2),
            "wd1": jnp.asarray(W1p), "bd1": jnp.asarray(bd1),
            "wd2": jnp.asarray(W2p), "bd2": jnp.asarray(bd2),
            "wd3": jnp.asarray(W3p), "bd3": jnp.asarray(bd3)}


# ---------------------------------------------------------------------------
# Pure-JAX reference (mirrors the torch forward) for a correctness check
# ---------------------------------------------------------------------------
def lenet_reference(x, p):
    hp = jax.lax.Precision.HIGHEST
    dn = ("NCHW", "OIHW", "NCHW")
    y = jax.lax.conv_general_dilated(x, p["conv1_w"], (1, 1), "VALID",
                                     dimension_numbers=dn, precision=hp)
    y = jnp.maximum(y + p["conv1_b"][None, :, None, None], 0.0)
    B, C, H, W = y.shape
    y = y.reshape(B, C, H // 2, 2, W // 2, 2).max(axis=(3, 5))
    y = jax.lax.conv_general_dilated(y, p["conv2_w"], (1, 1), "VALID",
                                     dimension_numbers=dn, precision=hp)
    y = jnp.maximum(y + p["conv2_b"][None, :, None, None], 0.0)
    B, C, H, W = y.shape
    y = y.reshape(B, C, H // 2, 2, W // 2, 2).max(axis=(3, 5))
    y = y.reshape(-1, 256)
    y = jnp.maximum(jnp.dot(y, p["dense1_w"].T, precision=hp) + p["dense1_b"], 0.0)
    y = jnp.maximum(jnp.dot(y, p["dense2_w"].T, precision=hp) + p["dense2_b"], 0.0)
    y = jnp.maximum(jnp.dot(y, p["dense3_w"].T, precision=hp) + p["dense3_b"], 0.0)
    return y


if __name__ == "__main__":
    key = jax.random.PRNGKey(0)
    pkey, xkey = jax.random.split(key)
    params = init_params(pkey)
    kparams = prepare_params(params)

    # LeNet's dense1 expects 256 = 16*4*4 features -> input must be 28x28.
    x = jax.random.normal(xkey, (2, 1, 28, 28), dtype=jnp.float32)

    fwd = jax.jit(lenet_forward)
    out = jax.block_until_ready(fwd(x, kparams))

    assert out.shape == (2, 2), out.shape
    assert bool(jnp.all(jnp.isfinite(out)))
    ref = lenet_reference(x, params)
    assert bool(jnp.allclose(out, ref, atol=2e-2, rtol=2e-2)), (out, ref)
    print("KERNEL_OK")
</pallas_src>

<mosaic_0001>
module attributes {stable_mosaic.version = 11 : i64} {
  func.func @lenet_kernel(%arg0: memref<4x2x7x28xf32, #tpu.memory_space<vmem>>, %arg1: memref<640x256xf32, #tpu.memory_space<vmem>>, %arg2: memref<1x256xf32, #tpu.memory_space<vmem>>, %arg3: memref<640x256xf32, #tpu.memory_space<vmem>>, %arg4: memref<1x256xf32, #tpu.memory_space<vmem>>, %arg5: memref<512x120xf32, #tpu.memory_space<vmem>>, %arg6: memref<1x120xf32, #tpu.memory_space<vmem>>, %arg7: memref<120x84xf32, #tpu.memory_space<vmem>>, %arg8: memref<1x84xf32, #tpu.memory_space<vmem>>, %arg9: memref<84x2xf32, #tpu.memory_space<vmem>>, %arg10: memref<1x2xf32, #tpu.memory_space<vmem>>, %arg11: memref<2x2xf32, #tpu.memory_space<vmem>>, %arg12: memref<48x640xf32, #tpu.memory_space<vmem>>, %arg13: memref<16x640xf32, #tpu.memory_space<vmem>>, %arg14: memref<2x512xf32, #tpu.memory_space<vmem>>) attributes {dimension_semantics = [], scalar_prefetch = 0 : i64, scratch_operands = 3 : i64, tpu.core_type = #tpu.core_type<tc>} {
    %cst = arith.constant 0.000000e+00 : f32
    %0 = vector.broadcast %cst : f32 to vector<48x640xf32>
    %c0 = arith.constant 0 : index
    %c0_0 = arith.constant 0 : index
    %1 = vector.load %arg12[%c0, %c0_0] : memref<48x640xf32, #tpu.memory_space<vmem>>, vector<48x640xf32>
    tpu.vector_store %arg12[%c0, %c0_0], %0 {strides = array<i32>} : memref<48x640xf32, #tpu.memory_space<vmem>>, vector<48x640xf32>,
    %c0_1 = arith.constant 0 : index
    %c0_2 = arith.constant 0 : index
    %c0_3 = arith.constant 0 : index
    %c0_4 = arith.constant 0 : index
    %2 = vector.load %arg0[%c0_1, %c0_2, %c0_3, %c0_4] : memref<4x2x7x28xf32, #tpu.memory_space<vmem>>, vector<1x1x6x28xf32>
    %3 = vector.shape_cast %2 : vector<1x1x6x28xf32> to vector<6x28xf32>
    %c0_5 = arith.constant 0 : index
    %c0_6 = arith.constant 0 : index
    %4 = vector.load %arg12[%c0_5, %c0_6] : memref<48x640xf32, #tpu.memory_space<vmem>>, vector<6x28xf32>
    tpu.vector_store %arg12[%c0_5, %c0_6], %3 {strides = array<i32>} : memref<48x640xf32, #tpu.memory_space<vmem>>, vector<6x28xf32>,
    %c1 = arith.constant 1 : index
    %c0_7 = arith.constant 0 : index
    %c0_8 = arith.constant 0 : index
    %c0_9 = arith.constant 0 : index
    %5 = vector.load %arg0[%c1, %c0_7, %c0_8, %c0_9] : memref<4x2x7x28xf32, #tpu.memory_space<vmem>>, vector<1x1x6x28xf32>
    %6 = vector.shape_cast %5 : vector<1x1x6x28xf32> to vector<6x28xf32>
    %c0_10 = arith.constant 0 : index
    %c128 = arith.constant 128 : index
    %7 = vector.load %arg12[%c0_10, %c128] : memref<48x640xf32, #tpu.memory_space<vmem>>, vector<6x28xf32>
    tpu.vector_store %arg12[%c0_10, %c128], %6 {strides = array<i32>} : memref<48x640xf32, #tpu.memory_space<vmem>>, vector<6x28xf32>,
    %c2 = arith.constant 2 : index
    %c0_11 = arith.constant 0 : index
    %c0_12 = arith.constant 0 : index
    %c0_13 = arith.constant 0 : index
    %8 = vector.load %arg0[%c2, %c0_11, %c0_12, %c0_13] : memref<4x2x7x28xf32, #tpu.memory_space<vmem>>, vector<1x1x6x28xf32>
    %9 = vector.shape_cast %8 : vector<1x1x6x28xf32> to vector<6x28xf32>
    %c0_14 = arith.constant 0 : index
    %c256 = arith.constant 256 : index
    %10 = vector.load %arg12[%c0_14, %c256] : memref<48x640xf32, #tpu.memory_space<vmem>>, vector<6x28xf32>
    tpu.vector_store %arg12[%c0_14, %c256], %9 {strides = array<i32>} : memref<48x640xf32, #tpu.memory_space<vmem>>, vector<6x28xf32>,
    %c3 = arith.constant 3 : index
    %c0_15 = arith.constant 0 : index
    %c0_16 = arith.constant 0 : index
    %c0_17 = arith.constant 0 : index
    %11 = vector.load %arg0[%c3, %c0_15, %c0_16, %c0_17] : memref<4x2x7x28xf32, #tpu.memory_space<vmem>>, vector<1x1x6x28xf32>
    %12 = vector.shape_cast %11 : vector<1x1x6x28xf32> to vector<6x28xf32>
    %c0_18 = arith.constant 0 : index
    %c384 = arith.constant 384 : index
    %13 = vector.load %arg12[%c0_18, %c384] : memref<48x640xf32, #tpu.memory_space<vmem>>, vector<6x28xf32>
    tpu.vector_store %arg12[%c0_18, %c384], %12 {strides = array<i32>} : memref<48x640xf32, #tpu.memory_space<vmem>>, vector<6x28xf32>,
    %c0_19 = arith.constant 0 : index
    %c0_20 = arith.constant 0 : index
    %c1_21 = arith.constant 1 : index
    %c0_22 = arith.constant 0 : index
    %14 = vector.load %arg0[%c0_19, %c0_20, %c1_21, %c0_22] : memref<4x2x7x28xf32, #tpu.memory_space<vmem>>, vector<1x1x6x28xf32>
    %15 = vector.shape_cast %14 : vector<1x1x6x28xf32> to vector<6x28xf32>
    %c0_23 = arith.constant 0 : index
    %c512 = arith.constant 512 : index
    %16 = vector.load %arg12[%c0_23, %c512] : memref<48x640xf32, #tpu.memory_space<vmem>>, vector<6x28xf32>
    tpu.vector_store %arg12[%c0_23, %c512], %15 {strides = array<i32>} : memref<48x640xf32, #tpu.memory_space<vmem>>, vector<6x28xf32>,
    %c2_24 = arith.constant 2 : index
    %c0_25 = arith.constant 0 : index
    %c0_26 = arith.constant 0 : index
    %c0_27 = arith.constant 0 : index
    %17 = vector.load %arg0[%c2_24, %c0_25, %c0_26, %c0_27] : memref<4x2x7x28xf32, #tpu.memory_space<vmem>>, vector<1x1x6x28xf32>
    %18 = vector.shape_cast %17 : vector<1x1x6x28xf32> to vector<6x28xf32>
    %c6 = arith.constant 6 : index
    %c0_28 = arith.constant 0 : index
    %19 = vector.load %arg12[%c6, %c0_28] : memref<48x640xf32, #tpu.memory_space<vmem>>, vector<6x28xf32>
    tpu.vector_store %arg12[%c6, %c0_28], %18 {strides = array<i32>} : memref<48x640xf32, #tpu.memory_space<vmem>>, vector<6x28xf32>,
    %c3_29 = arith.constant 3 : index
    %c0_30 = arith.constant 0 : index
    %c0_31 = arith.constant 0 : index
    %c0_32 = arith.constant 0 : index
    %20 = vector.load %arg0[%c3_29, %c0_30, %c0_31, %c0_32] : memref<4x2x7x28xf32, #tpu.memory_space<vmem>>, vector<1x1x6x28xf32>
    %21 = vector.shape_cast %20 : vector<1x1x6x28xf32> to vector<6x28xf32>
    %c6_33 = arith.constant 6 : index
    %c128_34 = arith.constant 128 : index
    %22 = vector.load %arg12[%c6_33, %c128_34] : memref<48x640xf32, #tpu.memory_space<vmem>>, vector<6x28xf32>
    tpu.vector_store %arg12[%c6_33, %c128_34], %21 {strides = array<i32>} : memref<48x640xf32, #tpu.memory_space<vmem>>, vector<6x28xf32>,
    %c0_35 = arith.constant 0 : index
    %c0_36 = arith.constant 0 : index
    %c1_37 = arith.constant 1 : index
    %c0_38 = arith.constant 0 : index
    %23 = vector.load %arg0[%c0_35, %c0_36, %c1_37, %c0_38] : memref<4x2x7x28xf32, #tpu.memory_space<vmem>>, vector<1x1x6x28xf32>
    %24 = vector.shape_cast %23 : vector<1x1x6x28xf32> to vector<6x28xf32>
    %c6_39 = arith.constant 6 : index
    %c256_40 = arith.constant 256 : index
    %25 = vector.load %arg12[%c6_39, %c256_40] : memref<48x640xf32, #tpu.memory_space<vmem>>, vector<6x28xf32>
    tpu.vector_store %arg12[%c6_39, %c256_40], %24 {strides = array<i32>} : memref<48x640xf32, #tpu.memory_space<vmem>>, vector<6x28xf32>,
    %c1_41 = arith.constant 1 : index
    %c0_42 = arith.constant 0 : index
    %c1_43 = arith.constant 1 : index
    %c0_44 = arith.constant 0 : index
    %26 = vector.load %arg0[%c1_41, %c0_42, %c1_43, %c0_44] : memref<4x2x7x28xf32, #tpu.memory_space<vmem>>, vector<1x1x6x28xf32>
    %27 = vector.shape_cast %26 : vector<1x1x6x28xf32> to vector<6x28xf32>
    %c6_45 = arith.constant 6 : index
    %c384_46 = arith.constant 384 : index
    %28 = vector.load %arg12[%c6_45, %c384_46] : memref<48x640xf32, #tpu.memory_space<vmem>>, vector<6x28xf32>
    tpu.vector_store %arg12[%c6_45, %c384_46], %27 {strides = array<i32>} : memref<48x640xf32, #tpu.memory_space<vmem>>, vector<6x28xf32>,
    %c2_47 = arith.constant 2 : index
    %c0_48 = arith.constant 0 : index
    %c1_49 = arith.constant 1 : index
    %c0_50 = arith.constant 0 : index
    %29 = vector.load %arg0[%c2_47, %c0_48, %c1_49, %c0_50] : memref<4x2x7x28xf32, #tpu.memory_space<vmem>>, vector<1x1x6x28xf32>
    %30 = vector.shape_cast %29 : vector<1x1x6x28xf32> to vector<6x28xf32>
    %c6_51 = arith.constant 6 : index
    %c512_52 = arith.constant 512 : index
    %31 = vector.load %arg12[%c6_51, %c512_52] : memref<48x640xf32, #tpu.memory_space<vmem>>, vector<6x28xf32>
    tpu.vector_store %arg12[%c6_51, %c512_52], %30 {strides = array<i32>} : memref<48x640xf32, #tpu.memory_space<vmem>>, vector<6x28xf32>,
    %c0_53 = arith.constant 0 : index
    %c1_54 = arith.constant 1 : index
    %c0_55 = arith.constant 0 : index
    %c0_56 = arith.constant 0 : index
    %32 = vector.load %arg0[%c0_53, %c1_54, %c0_55, %c0_56] : memref<4x2x7x28xf32, #tpu.memory_space<vmem>>, vector<1x1x6x28xf32>
    %33 = vector.shape_cast %32 : vector<1x1x6x28xf32> to vector<6x28xf32>
    %c12 = arith.constant 12 : index
    %c0_57 = arith.constant 0 : index
    %34 = vector.load %arg12[%c12, %c0_57] : memref<48x640xf32, #tpu.memory_space<vmem>>, vector<6x28xf32>
    tpu.vector_store %arg12[%c12, %c0_57], %33 {strides = array<i32>} : memref<48x640xf32, #tpu.memory_space<vmem>>, vector<6x28xf32>,
    %c1_58 = arith.constant 1 : index
    %c1_59 = arith.constant 1 : index
    %c0_60 = arith.constant 0 : index
    %c0_61 = arith.constant 0 : index
    %35 = vector.load %arg0[%c1_58, %c1_59, %c0_60, %c0_61] : memref<4x2x7x28xf32, #tpu.memory_space<vmem>>, vector<1x1x6x28xf32>
    %36 = vector.shape_cast %35 : vector<1x1x6x28xf32> to vector<6x28xf32>
    %c12_62 = arith.constant 12 : index
    %c128_63 = arith.constant 128 : index
    %37 = vector.load %arg12[%c12_62, %c128_63] : memref<48x640xf32, #tpu.memory_space<vmem>>, vector<6x28xf32>
    tpu.vector_store %arg12[%c12_62, %c128_63], %36 {strides = array<i32>} : memref<48x640xf32, #tpu.memory_space<vmem>>, vector<6x28xf32>,
    %c2_64 = arith.constant 2 : index
    %c1_65 = arith.constant 1 : index
    %c0_66 = arith.constant 0 : index
    %c0_67 = arith.constant 0 : index
    %38 = vector.load %arg0[%c2_64, %c1_65, %c0_66, %c0_67] : memref<4x2x7x28xf32, #tpu.memory_space<vmem>>, vector<1x1x6x28xf32>
    %39 = vector.shape_cast %38 : vector<1x1x6x28xf32> to vector<6x28xf32>
    %c12_68 = arith.constant 12 : index
    %c256_69 = arith.constant 256 : index
    %40 = vector.load %arg12[%c12_68, %c256_69] : memref<48x640xf32, #tpu.memory_space<vmem>>, vector<6x28xf32>
    tpu.vector_store %arg12[%c12_68, %c256_69], %39 {strides = array<i32>} : memref<48x640xf32, #tpu.memory_space<vmem>>, vector<6x28xf32>,
    %c3_70 = arith.constant 3 : index
    %c1_71 = arith.constant 1 : index
    %c0_72 = arith.constant 0 : index
    %c0_73 = arith.constant 0 : index
    %41 = vector.load %arg0[%c3_70, %c1_71, %c0_72, %c0_73] : memref<4x2x7x28xf32, #tpu.memory_space<vmem>>, vector<1x1x6x28xf32>
    %42 = vector.shape_cast %41 : vector<1x1x6x28xf32> to vector<6x28xf32>
    %c12_74 = arith.constant 12 : index
    %c384_75 = arith.constant 384 : index
    %43 = vector.load %arg12[%c12_74, %c384_75] : memref<48x640xf32, #tpu.memory_space<vmem>>, vector<6x28xf32>
    tpu.vector_store %arg12[%c12_74, %c384_75], %42 {strides = array<i32>} : memref<48x640xf32, #tpu.memory_space<vmem>>, vector<6x28xf32>,
    %c0_76 = arith.constant 0 : index
    %c1_77 = arith.constant 1 : index
    %c1_78 = arith.constant 1 : index
    %c0_79 = arith.constant 0 : index
    %44 = vector.load %arg0[%c0_76, %c1_77, %c1_78, %c0_79] : memref<4x2x7x28xf32, #tpu.memory_space<vmem>>, vector<1x1x6x28xf32>
    %45 = vector.shape_cast %44 : vector<1x1x6x28xf32> to vector<6x28xf32>
    %c12_80 = arith.constant 12 : index
    %c512_81 = arith.constant 512 : index
    %46 = vector.load %arg12[%c12_80, %c512_81] : memref<48x640xf32, #tpu.memory_space<vmem>>, vector<6x28xf32>
    tpu.vector_store %arg12[%c12_80, %c512_81], %45 {strides = array<i32>} : memref<48x640xf32, #tpu.memory_space<vmem>>, vector<6x28xf32>,
    %c2_82 = arith.constant 2 : index
    %c1_83 = arith.constant 1 : index
    %c0_84 = arith.constant 0 : index
    %c0_85 = arith.constant 0 : index
    %47 = vector.load %arg0[%c2_82, %c1_83, %c0_84, %c0_85] : memref<4x2x7x28xf32, #tpu.memory_space<vmem>>, vector<1x1x6x28xf32>
    %48 = vector.shape_cast %47 : vector<1x1x6x28xf32> to vector<6x28xf32>
    %c18 = arith.constant 18 : index
    %c0_86 = arith.constant 0 : index
    %49 = vector.load %arg12[%c18, %c0_86] : memref<48x640xf32, #tpu.memory_space<vmem>>, vector<6x28xf32>
    tpu.vector_store %arg12[%c18, %c0_86], %48 {strides = array<i32>} : memref<48x640xf32, #tpu.memory_space<vmem>>, vector<6x28xf32>,
    %c3_87 = arith.constant 3 : index
    %c1_88 = arith.constant 1 : index
    %c0_89 = arith.constant 0 : index
    %c0_90 = arith.constant 0 : index
    %50 = vector.load %arg0[%c3_87, %c1_88, %c0_89, %c0_90] : memref<4x2x7x28xf32, #tpu.memory_space<vmem>>, vector<1x1x6x28xf32>
    %51 = vector.shape_cast %50 : vector<1x1x6x28xf32> to vector<6x28xf32>
    %c18_91 = arith.constant 18 : index
    %c128_92 = arith.constant 128 : index
    %52 = vector.load %arg12[%c18_91, %c128_92] : memref<48x640xf32, #tpu.memory_space<vmem>>, vector<6x28xf32>
    tpu.vector_store %arg12[%c18_91, %c128_92], %51 {strides = array<i32>} : memref<48x640xf32, #tpu.memory_space<vmem>>, vector<6x28xf32>,
    %c0_93 = arith.constant 0 : index
    %c1_94 = arith.constant 1 : index
    %c1_95 = arith.constant 1 : index
    %c0_96 = arith.constant 0 : index
    %53 = vector.load %arg0[%c0_93, %c1_94, %c1_95, %c0_96] : memref<4x2x7x28xf32, #tpu.memory_space<vmem>>, vector<1x1x6x28xf32>
    %54 = vector.shape_cast %53 : vector<1x1x6x28xf32> to vector<6x28xf32>
    %c18_97 = arith.constant 18 : index
    %c256_98 = arith.constant 256 : index
    %55 = vector.load %arg12[%c18_97, %c256_98] : memref<48x640xf32, #tpu.memory_space<vmem>>, vector<6x28xf32>
    tpu.vector_store %arg12[%c18_97, %c256_98], %54 {strides = array<i32>} : memref<48x640xf32, #tpu.memory_space<vmem>>, vector<6x28xf32>,
    %c1_99 = arith.constant 1 : index
    %c1_100 = arith.constant 1 : index
    %c1_101 = arith.constant 1 : index
    %c0_102 = arith.constant 0 : index
    %56 = vector.load %arg0[%c1_99, %c1_100, %c1_101, %c0_102] : memref<4x2x7x28xf32, #tpu.memory_space<vmem>>, vector<1x1x6x28xf32>
    %57 = vector.shape_cast %56 : vector<1x1x6x28xf32> to vector<6x28xf32>
    %c18_103 = arith.constant 18 : index
    %c384_104 = arith.constant 384 : index
    %58 = vector.load %arg12[%c18_103, %c384_104] : memref<48x640xf32, #tpu.memory_space<vmem>>, vector<6x28xf32>
    tpu.vector_store %arg12[%c18_103, %c384_104], %57 {strides = array<i32>} : memref<48x640xf32, #tpu.memory_space<vmem>>, vector<6x28xf32>,
    %c2_105 = arith.constant 2 : index
    %c1_106 = arith.constant 1 : index
    %c1_107 = arith.constant 1 : index
    %c0_108 = arith.constant 0 : index
    %59 = vector.load %arg0[%c2_105, %c1_106, %c1_107, %c0_108] : memref<4x2x7x28xf32, #tpu.memory_space<vmem>>, vector<1x1x6x28xf32>
    %60 = vector.shape_cast %59 : vector<1x1x6x28xf32> to vector<6x28xf32>
    %c18_109 = arith.constant 18 : index
    %c512_110 = arith.constant 512 : index
    %61 = vector.load %arg12[%c18_109, %c512_110] : memref<48x640xf32, #tpu.memory_space<vmem>>, vector<6x28xf32>
    tpu.vector_store %arg12[%c18_109, %c512_110], %60 {strides = array<i32>} : memref<48x640xf32, #tpu.memory_space<vmem>>, vector<6x28xf32>,
    %c1_111 = arith.constant 1 : index
    %c0_112 = arith.constant 0 : index
    %c0_113 = arith.constant 0 : index
    %c0_114 = arith.constant 0 : index
    %62 = vector.load %arg0[%c1_111, %c0_112, %c0_113, %c0_114] : memref<4x2x7x28xf32, #tpu.memory_space<vmem>>, vector<1x1x6x28xf32>
    %63 = vector.shape_cast %62 : vector<1x1x6x28xf32> to vector<6x28xf32>
    %c24 = arith.constant 24 : index
    %c0_115 = arith.constant 0 : index
    %64 = vector.load %arg12[%c24, %c0_115] : memref<48x640xf32, #tpu.memory_space<vmem>>, vector<6x28xf32>
    tpu.vector_store %arg12[%c24, %c0_115], %63 {strides = array<i32>} : memref<48x640xf32, #tpu.memory_space<vmem>>, vector<6x28xf32>,
    %c2_116 = arith.constant 2 : index
    %c0_117 = arith.constant 0 : index
    %c0_118 = arith.constant 0 : index
    %c0_119 = arith.constant 0 : index
    %65 = vector.load %arg0[%c2_116, %c0_117, %c0_118, %c0_119] : memref<4x2x7x28xf32, #tpu.memory_space<vmem>>, vector<1x1x6x28xf32>
    %66 = vector.shape_cast %65 : vector<1x1x6x28xf32> to vector<6x28xf32>
    %c24_120 = arith.constant 24 : index
    %c128_121 = arith.constant 128 : index
    %67 = vector.load %arg12[%c24_120, %c128_121] : memref<48x640xf32, #tpu.memory_space<vmem>>, vector<6x28xf32>
    tpu.vector_store %arg12[%c24_120, %c128_121], %66 {strides = array<i32>} : memref<48x640xf32, #tpu.memory_space<vmem>>, vector<6x28xf32>,
    %c3_122 = arith.constant 3 : index
    %c0_123 = arith.constant 0 : index
    %c0_124 = arith.constant 0 : index
    %c0_125 = arith.constant 0 : index
    %68 = vector.load %arg0[%c3_122, %c0_123, %c0_124, %c0_125] : memref<4x2x7x28xf32, #tpu.memory_space<vmem>>, vector<1x1x6x28xf32>
    %69 = vector.shape_cast %68 : vector<1x1x6x28xf32> to vector<6x28xf32>
    %c24_126 = arith.constant 24 : index
    %c256_127 = arith.constant 256 : index
    %70 = vector.load %arg12[%c24_126, %c256_127] : memref<48x640xf32, #tpu.memory_space<vmem>>, vector<6x28xf32>
    tpu.vector_store %arg12[%c24_126, %c256_127], %69 {strides = array<i32>} : memref<48x640xf32, #tpu.memory_space<vmem>>, vector<6x28xf32>,
    %c0_128 = arith.constant 0 : index
    %c0_129 = arith.constant 0 : index
    %c1_130 = arith.constant 1 : index
    %c0_131 = arith.constant 0 : index
    %71 = vector.load %arg0[%c0_128, %c0_129, %c1_130, %c0_131] : memref<4x2x7x28xf32, #tpu.memory_space<vmem>>, vector<1x1x6x28xf32>
    %72 = vector.shape_cast %71 : vector<1x1x6x28xf32> to vector<6x28xf32>
    %c24_132 = arith.constant 24 : index
    %c384_133 = arith.constant 384 : index
    %73 = vector.load %arg12[%c24_132, %c384_133] : memref<48x640xf32, #tpu.memory_space<vmem>>, vector<6x28xf32>
    tpu.vector_store %arg12[%c24_132, %c384_133], %72 {strides = array<i32>} : memref<48x640xf32, #tpu.memory_space<vmem>>, vector<6x28xf32>,
    %c1_134 = arith.constant 1 : index
    %c0_135 = arith.constant 0 : index
    %c1_136 = arith.constant 1 : index
    %c0_137 = arith.constant 0 : index
    %74 = vector.load %arg0[%c1_134, %c0_135, %c1_136, %c0_137] : memref<4x2x7x28xf32, #tpu.memory_space<vmem>>, vector<1x1x6x28xf32>
    %75 = vector.shape_cast %74 : vector<1x1x6x28xf32> to vector<6x28xf32>
    %c24_138 = arith.constant 24 : index
    %c512_139 = arith.constant 512 : index
    %76 = vector.load %arg12[%c24_138, %c512_139] : memref<48x640xf32, #tpu.memory_space<vmem>>, vector<6x28xf32>
    tpu.vector_store %arg12[%c24_138, %c512_139], %75 {strides = array<i32>} : memref<48x640xf32, #tpu.memory_space<vmem>>, vector<6x28xf32>,
    %c3_140 = arith.constant 3 : index
    %c0_141 = arith.constant 0 : index
    %c0_142 = arith.constant 0 : index
    %c0_143 = arith.constant 0 : index
    %77 = vector.load %arg0[%c3_140, %c0_141, %c0_142, %c0_143] : memref<4x2x7x28xf32, #tpu.memory_space<vmem>>, vector<1x1x6x28xf32>
    %78 = vector.shape_cast %77 : vector<1x1x6x28xf32> to vector<6x28xf32>
    %c30 = arith.constant 30 : index
    %c0_144 = arith.constant 0 : index
    %79 = vector.load %arg12[%c30, %c0_144] : memref<48x640xf32, #tpu.memory_space<vmem>>, vector<6x28xf32>
    tpu.vector_store %arg12[%c30, %c0_144], %78 {strides = array<i32>} : memref<48x640xf32, #tpu.memory_space<vmem>>, vector<6x28xf32>,
    %c0_145 = arith.constant 0 : index
    %c0_146 = arith.constant 0 : index
    %c1_147 = arith.constant 1 : index
    %c0_148 = arith.constant 0 : index
    %80 = vector.load %arg0[%c0_145, %c0_146, %c1_147, %c0_148] : memref<4x2x7x28xf32, #tpu.memory_space<vmem>>, vector<1x1x6x28xf32>
    %81 = vector.shape_cast %80 : vector<1x1x6x28xf32> to vector<6x28xf32>
    %c30_149 = arith.constant 30 : index
    %c128_150 = arith.constant 128 : index
    %82 = vector.load %arg12[%c30_149, %c128_150] : memref<48x640xf32, #tpu.memory_space<vmem>>, vector<6x28xf32>
    tpu.vector_store %arg12[%c30_149, %c128_150], %81 {strides = array<i32>} : memref<48x640xf32, #tpu.memory_space<vmem>>, vector<6x28xf32>,
    %c1_151 = arith.constant 1 : index
    %c0_152 = arith.constant 0 : index
    %c1_153 = arith.constant 1 : index
    %c0_154 = arith.constant 0 : index
    %83 = vector.load %arg0[%c1_151, %c0_152, %c1_153, %c0_154] : memref<4x2x7x28xf32, #tpu.memory_space<vmem>>, vector<1x1x6x28xf32>
    %84 = vector.shape_cast %83 : vector<1x1x6x28xf32> to vector<6x28xf32>
    %c30_155 = arith.constant 30 : index
    %c256_156 = arith.constant 256 : index
    %85 = vector.load %arg12[%c30_155, %c256_156] : memref<48x640xf32, #tpu.memory_space<vmem>>, vector<6x28xf32>
    tpu.vector_store %arg12[%c30_155, %c256_156], %84 {strides = array<i32>} : memref<48x640xf32, #tpu.memory_space<vmem>>, vector<6x28xf32>,
    %c2_157 = arith.constant 2 : index
    %c0_158 = arith.constant 0 : index
    %c1_159 = arith.constant 1 : index
    %c0_160 = arith.constant 0 : index
    %86 = vector.load %arg0[%c2_157, %c0_158, %c1_159, %c0_160] : memref<4x2x7x28xf32, #tpu.memory_space<vmem>>, vector<1x1x6x28xf32>
    %87 = vector.shape_cast %86 : vector<1x1x6x28xf32> to vector<6x28xf32>
    %c30_161 = arith.constant 30 : index
    %c384_162 = arith.constant 384 : index
    %88 = vector.load %arg12[%c30_161, %c384_162] : memref<48x640xf32, #tpu.memory_space<vmem>>, vector<6x28xf32>
    tpu.vector_store %arg12[%c30_161, %c384_162], %87 {strides = array<i32>} : memref<48x640xf32, #tpu.memory_space<vmem>>, vector<6x28xf32>,
    %c3_163 = arith.constant 3 : index
    %c0_164 = arith.constant 0 : index
    %c1_165 = arith.constant 1 : index
    %c0_166 = arith.constant 0 : index
    %89 = vector.load %arg0[%c3_163, %c0_164, %c1_165, %c0_166] : memref<4x2x7x28xf32, #tpu.memory_space<vmem>>, vector<1x1x6x28xf32>
    %90 = vector.shape_cast %89 : vector<1x1x6x28xf32> to vector<6x28xf32>
    %c30_167 = arith.constant 30 : index
    %c512_168 = arith.constant 512 : index
    %91 = vector.load %arg12[%c30_167, %c512_168] : memref<48x640xf32, #tpu.memory_space<vmem>>, vector<6x28xf32>
    tpu.vector_store %arg12[%c30_167, %c512_168], %90 {strides = array<i32>} : memref<48x640xf32, #tpu.memory_space<vmem>>, vector<6x28xf32>,
    %c1_169 = arith.constant 1 : index
    %c1_170 = arith.constant 1 : index
    %c0_171 = arith.constant 0 : index
    %c0_172 = arith.constant 0 : index
    %92 = vector.load %arg0[%c1_169, %c1_170, %c0_171, %c0_172] : memref<4x2x7x28xf32, #tpu.memory_space<vmem>>, vector<1x1x6x28xf32>
    %93 = vector.shape_cast %92 : vector<1x1x6x28xf32> to vector<6x28xf32>
    %c36 = arith.constant 36 : index
    %c0_173 = arith.constant 0 : index
    %94 = vector.load %arg12[%c36, %c0_173] : memref<48x640xf32, #tpu.memory_space<vmem>>, vector<6x28xf32>
    tpu.vector_store %arg12[%c36, %c0_173], %93 {strides = array<i32>} : memref<48x640xf32, #tpu.memory_space<vmem>>, vector<6x28xf32>,
    %c2_174 = arith.constant 2 : index
    %c1_175 = arith.constant 1 : index
    %c0_176 = arith.constant 0 : index
    %c0_177 = arith.constant 0 : index
    %95 = vector.load %arg0[%c2_174, %c1_175, %c0_176, %c0_177] : memref<4x2x7x28xf32, #tpu.memory_space<vmem>>, vector<1x1x6x28xf32>
    %96 = vector.shape_cast %95 : vector<1x1x6x28xf32> to vector<6x28xf32>
    %c36_178 = arith.constant 36 : index
    %c128_179 = arith.constant 128 : index
    %97 = vector.load %arg12[%c36_178, %c128_179] : memref<48x640xf32, #tpu.memory_space<vmem>>, vector<6x28xf32>
    tpu.vector_store %arg12[%c36_178, %c128_179], %96 {strides = array<i32>} : memref<48x640xf32, #tpu.memory_space<vmem>>, vector<6x28xf32>,
    %c3_180 = arith.constant 3 : index
    %c1_181 = arith.constant 1 : index
    %c0_182 = arith.constant 0 : index
    %c0_183 = arith.constant 0 : index
    %98 = vector.load %arg0[%c3_180, %c1_181, %c0_182, %c0_183] : memref<4x2x7x28xf32, #tpu.memory_space<vmem>>, vector<1x1x6x28xf32>
    %99 = vector.shape_cast %98 : vector<1x1x6x28xf32> to vector<6x28xf32>
    %c36_184 = arith.constant 36 : index
    %c256_185 = arith.constant 256 : index
    %100 = vector.load %arg12[%c36_184, %c256_185] : memref<48x640xf32, #tpu.memory_space<vmem>>, vector<6x28xf32>
    tpu.vector_store %arg12[%c36_184, %c256_185], %99 {strides = array<i32>} : memref<48x640xf32, #tpu.memory_space<vmem>>, vector<6x28xf32>,
    %c0_186 = arith.constant 0 : index
    %c1_187 = arith.constant 1 : index
    %c1_188 = arith.constant 1 : index
    %c0_189 = arith.constant 0 : index
    %101 = vector.load %arg0[%c0_186, %c1_187, %c1_188, %c0_189] : memref<4x2x7x28xf32, #tpu.memory_space<vmem>>, vector<1x1x6x28xf32>
    %102 = vector.shape_cast %101 : vector<1x1x6x28xf32> to vector<6x28xf32>
    %c36_190 = arith.constant 36 : index
    %c384_191 = arith.constant 384 : index
    %103 = vector.load %arg12[%c36_190, %c384_191] : memref<48x640xf32, #tpu.memory_space<vmem>>, vector<6x28xf32>
    tpu.vector_store %arg12[%c36_190, %c384_191], %102 {strides = array<i32>} : memref<48x640xf32, #tpu.memory_space<vmem>>, vector<6x28xf32>,
    %c1_192 = arith.constant 1 : index
    %c1_193 = arith.constant 1 : index
    %c1_194 = arith.constant 1 : index
    %c0_195 = arith.constant 0 : index
    %104 = vector.load %arg0[%c1_192, %c1_193, %c1_194, %c0_195] : memref<4x2x7x28xf32, #tpu.memory_space<vmem>>, vector<1x1x6x28xf32>
    %105 = vector.shape_cast %104 : vector<1x1x6x28xf32> to vector<6x28xf32>
    %c36_196 = arith.constant 36 : index
    %c512_197 = arith.constant 512 : index
    %106 = vector.load %arg12[%c36_196, %c512_197] : memref<48x640xf32, #tpu.memory_space<vmem>>, vector<6x28xf32>
    tpu.vector_store %arg12[%c36_196, %c512_197], %105 {strides = array<i32>} : memref<48x640xf32, #tpu.memory_space<vmem>>, vector<6x28xf32>,
    %c3_198 = arith.constant 3 : index
    %c1_199 = arith.constant 1 : index
    %c0_200 = arith.constant 0 : index
    %c0_201 = arith.constant 0 : index
    %107 = vector.load %arg0[%c3_198, %c1_199, %c0_200, %c0_201] : memref<4x2x7x28xf32, #tpu.memory_space<vmem>>, vector<1x1x6x28xf32>
    %108 = vector.shape_cast %107 : vector<1x1x6x28xf32> to vector<6x28xf32>
    %c42 = arith.constant 42 : index
    %c0_202 = arith.constant 0 : index
    %109 = vector.load %arg12[%c42, %c0_202] : memref<48x640xf32, #tpu.memory_space<vmem>>, vector<6x28xf32>
    tpu.vector_store %arg12[%c42, %c0_202], %108 {strides = array<i32>} : memref<48x640xf32, #tpu.memory_space<vmem>>, vector<6x28xf32>,
    %c0_203 = arith.constant 0 : index
    %c1_204 = arith.constant 1 : index
    %c1_205 = arith.constant 1 : index
    %c0_206 = arith.constant 0 : index
    %110 = vector.load %arg0[%c0_203, %c1_204, %c1_205, %c0_206] : memref<4x2x7x28xf32, #tpu.memory_space<vmem>>, vector<1x1x6x28xf32>
    %111 = vector.shape_cast %110 : vector<1x1x6x28xf32> to vector<6x28xf32>
    %c42_207 = arith.constant 42 : index
    %c128_208 = arith.constant 128 : index
    %112 = vector.load %arg12[%c42_207, %c128_208] : memref<48x640xf32, #tpu.memory_space<vmem>>, vector<6x28xf32>
    tpu.vector_store %arg12[%c42_207, %c128_208], %111 {strides = array<i32>} : memref<48x640xf32, #tpu.memory_space<vmem>>, vector<6x28xf32>,
    %c1_209 = arith.constant 1 : index
    %c1_210 = arith.constant 1 : index
    %c1_211 = arith.constant 1 : index
    %c0_212 = arith.constant 0 : index
    %113 = vector.load %arg0[%c1_209, %c1_210, %c1_211, %c0_212] : memref<4x2x7x28xf32, #tpu.memory_space<vmem>>, vector<1x1x6x28xf32>
    %114 = vector.shape_cast %113 : vector<1x1x6x28xf32> to vector<6x28xf32>
    %c42_213 = arith.constant 42 : index
    %c256_214 = arith.constant 256 : index
    %115 = vector.load %arg12[%c42_213, %c256_214] : memref<48x640xf32, #tpu.memory_space<vmem>>, vector<6x28xf32>
    tpu.vector_store %arg12[%c42_213, %c256_214], %114 {strides = array<i32>} : memref<48x640xf32, #tpu.memory_space<vmem>>, vector<6x28xf32>,
    %c2_215 = arith.constant 2 : index
    %c1_216 = arith.constant 1 : index
    %c1_217 = arith.constant 1 : index
    %c0_218 = arith.constant 0 : index
    %116 = vector.load %arg0[%c2_215, %c1_216, %c1_217, %c0_218] : memref<4x2x7x28xf32, #tpu.memory_space<vmem>>, vector<1x1x6x28xf32>
    %117 = vector.shape_cast %116 : vector<1x1x6x28xf32> to vector<6x28xf32>
    %c42_219 = arith.constant 42 : index
    %c384_220 = arith.constant 384 : index
    %118 = vector.load %arg12[%c42_219, %c384_220] : memref<48x640xf32, #tpu.memory_space<vmem>>, vector<6x28xf32>
    tpu.vector_store %arg12[%c42_219, %c384_220], %117 {strides = array<i32>} : memref<48x640xf32, #tpu.memory_space<vmem>>, vector<6x28xf32>,
    %c3_221 = arith.constant 3 : index
    %c1_222 = arith.constant 1 : index
    %c1_223 = arith.constant 1 : index
    %c0_224 = arith.constant 0 : index
    %119 = vector.load %arg0[%c3_221, %c1_222, %c1_223, %c0_224] : memref<4x2x7x28xf32, #tpu.memory_space<vmem>>, vector<1x1x6x28xf32>
    %120 = vector.shape_cast %119 : vector<1x1x6x28xf32> to vector<6x28xf32>
    %c42_225 = arith.constant 42 : index
    %c512_226 = arith.constant 512 : index
    %121 = vector.load %arg12[%c42_225, %c512_226] : memref<48x640xf32, #tpu.memory_space<vmem>>, vector<6x28xf32>
    tpu.vector_store %arg12[%c42_225, %c512_226], %120 {strides = array<i32>} : memref<48x640xf32, #tpu.memory_space<vmem>>, vector<6x28xf32>,
    %c0_227 = arith.constant 0 : index
    %c0_228 = arith.constant 0 : index
    %122 = vector.load %arg12[%c0_227, %c0_228] : memref<48x640xf32, #tpu.memory_space<vmem>>, vector<48x640xf32>
    %c0_229 = arith.constant 0 : index
    %c0_230 = arith.constant 0 : index
    %123 = vector.load %arg1[%c0_229, %c0_230] : memref<640x256xf32, #tpu.memory_space<vmem>>, vector<640x256xf32>
    %cst_231 = arith.constant dense<0.000000e+00> : vector<48x256xf32>
    %124 = tpu.matmul %122, %123, %cst_231 {dimension_numbers = #tpu.dot_dimension_numbers<[1], [0], [0], [1], [0, 0, 1, 1], [], []>} : vector<48x640xf32>, vector<640x256xf32>, vector<48x256xf32> -> vector<48x256xf32>
    %c0_232 = arith.constant 0 : index
    %c0_233 = arith.constant 0 : index
    %125 = vector.load %arg2[%c0_232, %c0_233] : memref<1x256xf32, #tpu.memory_space<vmem>>, vector<1x256xf32>
    %126 = vector.broadcast %125 : vector<1x256xf32> to vector<48x256xf32>
    %127 = arith.addf %124, %126 : vector<48x256xf32>
    %cst_234 = arith.constant 0.000000e+00 : f32
    %128 = vector.broadcast %cst_234 : f32 to vector<48x256xf32>
    %129 = arith.maximumf %127, %128 : vector<48x256xf32>
    %130 = vector.extract_strided_slice %129 {offsets = [0, 0], sizes = [24, 256], strides = [1, 1]} : vector<48x256xf32> to vector<24x256xf32>
    %131 = vector.extract_strided_slice %129 {offsets = [24, 0], sizes = [24, 256], strides = [1, 1]} : vector<48x256xf32> to vector<24x256xf32>
    %132 = arith.maximumf %130, %131 : vector<24x256xf32>
    %133 = vector.extract_strided_slice %132 {offsets = [0, 0], sizes = [24, 128], strides = [1, 1]} : vector<24x256xf32> to vector<24x128xf32>
    %134 = vector.extract_strided_slice %132 {offsets = [0, 128], sizes = [24, 128], strides = [1, 1]} : vector<24x256xf32> to vector<24x128xf32>
    %135 = arith.maximumf %133, %134 : vector<24x128xf32>
    %136 = vector.extract_strided_slice %135 {offsets = [0, 0], sizes = [4, 128], strides = [1, 1]} : vector<24x128xf32> to vector<4x128xf32>
    %c0_235 = arith.constant 0 : index
    %c0_236 = arith.constant 0 : index
    %137 = vector.load %arg13[%c0_235, %c0_236] : memref<16x640xf32, #tpu.memory_space<vmem>>, vector<4x128xf32>
    tpu.vector_store %arg13[%c0_235, %c0_236], %136 {strides = array<i32>} : memref<16x640xf32, #tpu.memory_space<vmem>>, vector<4x128xf32>,
    %138 = vector.extract_strided_slice %135 {offsets = [6, 0], sizes = [4, 128], strides = [1, 1]} : vector<24x128xf32> to vector<4x128xf32>
    %c0_237 = arith.constant 0 : index
    %c128_238 = arith.constant 128 : index
    %139 = vector.load %arg13[%c0_237, %c128_238] : memref<16x640xf32, #tpu.memory_space<vmem>>, vector<4x128xf32>
    tpu.vector_store %arg13[%c0_237, %c128_238], %138 {strides = array<i32>} : memref<16x640xf32, #tpu.memory_space<vmem>>, vector<4x128xf32>,
    %140 = vector.extract_strided_slice %135 {offsets = [1, 0], sizes = [4, 128], strides = [1, 1]} : vector<24x128xf32> to vector<4x128xf32>
    %c0_239 = arith.constant 0 : index
    %c256_240 = arith.constant 256 : index
    %141 = vector.load %arg13[%c0_239, %c256_240] : memref<16x640xf32, #tpu.memory_space<vmem>>, vector<4x128xf32>
    tpu.vector_store %arg13[%c0_239, %c256_240], %140 {strides = array<i32>} : memref<16x640xf32, #tpu.memory_space<vmem>>, vector<4x128xf32>,
    %142 = vector.extract_strided_slice %135 {offsets = [7, 0], sizes = [4, 128], strides = [1, 1]} : vector<24x128xf32> to vector<4x128xf32>
    %c0_241 = arith.constant 0 : index
    %c384_242 = arith.constant 384 : index
    %143 = vector.load %arg13[%c0_241, %c384_242] : memref<16x640xf32, #tpu.memory_space<vmem>>, vector<4x128xf32>
    tpu.vector_store %arg13[%c0_241, %c384_242], %142 {strides = array<i32>} : memref<16x640xf32, #tpu.memory_space<vmem>>, vector<4x128xf32>,
    %144 = vector.extract_strided_slice %135 {offsets = [2, 0], sizes = [4, 128], strides = [1, 1]} : vector<24x128xf32> to vector<4x128xf32>
    %c0_243 = arith.constant 0 : index
    %c512_244 = arith.constant 512 : index
    %145 = vector.load %arg13[%c0_243, %c512_244] : memref<16x640xf32, #tpu.memory_space<vmem>>, vector<4x128xf32>
    tpu.vector_store %arg13[%c0_243, %c512_244], %144 {strides = array<i32>} : memref<16x640xf32, #tpu.memory_space<vmem>>, vector<4x128xf32>,
    %146 = vector.extract_strided_slice %135 {offsets = [12, 0], sizes = [4, 128], strides = [1, 1]} : vector<24x128xf32> to vector<4x128xf32>
    %c4 = arith.constant 4 : index
    %c0_245 = arith.constant 0 : index
    %147 = vector.load %arg13[%c4, %c0_245] : memref<16x640xf32, #tpu.memory_space<vmem>>, vector<4x128xf32>
    tpu.vector_store %arg13[%c4, %c0_245], %146 {strides = array<i32>} : memref<16x640xf32, #tpu.memory_space<vmem>>, vector<4x128xf32>,
    %148 = vector.extract_strided_slice %135 {offsets = [18, 0], sizes = [4, 128], strides = [1, 1]} : vector<24x128xf32> to vector<4x128xf32>
    %c4_246 = arith.constant 4 : index
    %c128_247 = arith.constant 128 : index
    %149 = vector.load %arg13[%c4_246, %c128_247] : memref<16x640xf32, #tpu.memory_space<vmem>>, vector<4x128xf32>
    tpu.vector_store %arg13[%c4_246, %c128_247], %148 {strides = array<i32>} : memref<16x640xf32, #tpu.memory_space<vmem>>, vector<4x128xf32>,
    %150 = vector.extract_strided_slice %135 {offsets = [13, 0], sizes = [4, 128], strides = [1, 1]} : vector<24x128xf32> to vector<4x128xf32>
    %c4_248 = arith.constant 4 : index
    %c256_249 = arith.constant 256 : index
    %151 = vector.load %arg13[%c4_248, %c256_249] : memref<16x640xf32, #tpu.memory_space<vmem>>, vector<4x128xf32>
    tpu.vector_store %arg13[%c4_248, %c256_249], %150 {strides = array<i32>} : memref<16x640xf32, #tpu.memory_space<vmem>>, vector<4x128xf32>,
    %152 = vector.extract_strided_slice %135 {offsets = [19, 0], sizes = [4, 128], strides = [1, 1]} : vector<24x128xf32> to vector<4x128xf32>
    %c4_250 = arith.constant 4 : index
    %c384_251 = arith.constant 384 : index
    %153 = vector.load %arg13[%c4_250, %c384_251] : memref<16x640xf32, #tpu.memory_space<vmem>>, vector<4x128xf32>
    tpu.vector_store %arg13[%c4_250, %c384_251], %152 {strides = array<i32>} : memref<16x640xf32, #tpu.memory_space<vmem>>, vector<4x128xf32>,
    %154 = vector.extract_strided_slice %135 {offsets = [14, 0], sizes = [4, 128], strides = [1, 1]} : vector<24x128xf32> to vector<4x128xf32>
    %c4_252 = arith.constant 4 : index
    %c512_253 = arith.constant 512 : index
    %155 = vector.load %arg13[%c4_252, %c512_253] : memref<16x640xf32, #tpu.memory_space<vmem>>, vector<4x128xf32>
    tpu.vector_store %arg13[%c4_252, %c512_253], %154 {strides = array<i32>} : memref<16x640xf32, #tpu.memory_space<vmem>>, vector<4x128xf32>,
    %156 = vector.extract_strided_slice %135 {offsets = [6, 0], sizes = [4, 128], strides = [1, 1]} : vector<24x128xf32> to vector<4x128xf32>
    %c8 = arith.constant 8 : index
    %c0_254 = arith.constant 0 : index
    %157 = vector.load %arg13[%c8, %c0_254] : memref<16x640xf32, #tpu.memory_space<vmem>>, vector<4x128xf32>
    tpu.vector_store %arg13[%c8, %c0_254], %156 {strides = array<i32>} : memref<16x640xf32, #tpu.memory_space<vmem>>, vector<4x128xf32>,
    %158 = vector.extract_strided_slice %135 {offsets = [1, 0], sizes = [4, 128], strides = [1, 1]} : vector<24x128xf32> to vector<4x128xf32>
    %c8_255 = arith.constant 8 : index
    %c128_256 = arith.constant 128 : index
    %159 = vector.load %arg13[%c8_255, %c128_256] : memref<16x640xf32, #tpu.memory_space<vmem>>, vector<4x128xf32>
    tpu.vector_store %arg13[%c8_255, %c128_256], %158 {strides = array<i32>} : memref<16x640xf32, #tpu.memory_space<vmem>>, vector<4x128xf32>,
    %160 = vector.extract_strided_slice %135 {offsets = [7, 0], sizes = [4, 128], strides = [1, 1]} : vector<24x128xf32> to vector<4x128xf32>
    %c8_257 = arith.constant 8 : index
    %c256_258 = arith.constant 256 : index
    %161 = vector.load %arg13[%c8_257, %c256_258] : memref<16x640xf32, #tpu.memory_space<vmem>>, vector<4x128xf32>
    tpu.vector_store %arg13[%c8_257, %c256_258], %160 {strides = array<i32>} : memref<16x640xf32, #tpu.memory_space<vmem>>, vector<4x128xf32>,
    %162 = vector.extract_strided_slice %135 {offsets = [2, 0], sizes = [4, 128], strides = [1, 1]} : vector<24x128xf32> to vector<4x128xf32>
    %c8_259 = arith.constant 8 : index
    %c384_260 = arith.constant 384 : index
    %163 = vector.load %arg13[%c8_259, %c384_260] : memref<16x640xf32, #tpu.memory_space<vmem>>, vector<4x128xf32>
    tpu.vector_store %arg13[%c8_259, %c384_260], %162 {strides = array<i32>} : memref<16x640xf32, #tpu.memory_space<vmem>>, vector<4x128xf32>,
    %164 = vector.extract_strided_slice %135 {offsets = [8, 0], sizes = [4, 128], strides = [1, 1]} : vector<24x128xf32> to vector<4x128xf32>
    %c8_261 = arith.constant 8 : index
    %c512_262 = arith.constant 512 : index
    %165 = vector.load %arg13[%c8_261, %c512_262] : memref<16x640xf32, #tpu.memory_space<vmem>>, vector<4x128xf32>
    tpu.vector_store %arg13[%c8_261, %c512_262], %164 {strides = array<i32>} : memref<16x640xf32, #tpu.memory_space<vmem>>, vector<4x128xf32>,
    %166 = vector.extract_strided_slice %135 {offsets = [18, 0], sizes = [4, 128], strides = [1, 1]} : vector<24x128xf32> to vector<4x128xf32>
    %c12_263 = arith.constant 12 : index
    %c0_264 = arith.constant 0 : index
    %167 = vector.load %arg13[%c12_263, %c0_264] : memref<16x640xf32, #tpu.memory_space<vmem>>, vector<4x128xf32>
    tpu.vector_store %arg13[%c12_263, %c0_264], %166 {strides = array<i32>} : memref<16x640xf32, #tpu.memory_space<vmem>>, vector<4x128xf32>,
    %168 = vector.extract_strided_slice %135 {offsets = [13, 0], sizes = [4, 128], strides = [1, 1]} : vector<24x128xf32> to vector<4x128xf32>
    %c12_265 = arith.constant 12 : index
    %c128_266 = arith.constant 128 : index
    %169 = vector.load %arg13[%c12_265, %c128_266] : memref<16x640xf32, #tpu.memory_space<vmem>>, vector<4x128xf32>
    tpu.vector_store %arg13[%c12_265, %c128_266], %168 {strides = array<i32>} : memref<16x640xf32, #tpu.memory_space<vmem>>, vector<4x128xf32>,
    %170 = vector.extract_strided_slice %135 {offsets = [19, 0], sizes = [4, 128], strides = [1, 1]} : vector<24x128xf32> to vector<4x128xf32>
    %c12_267 = arith.constant 12 : index
    %c256_268 = arith.constant 256 : index
    %171 = vector.load %arg13[%c12_267, %c256_268] : memref<16x640xf32, #tpu.memory_space<vmem>>, vector<4x128xf32>
    tpu.vector_store %arg13[%c12_267, %c256_268], %170 {strides = array<i32>} : memref<16x640xf32, #tpu.memory_space<vmem>>, vector<4x128xf32>,
    %172 = vector.extract_strided_slice %135 {offsets = [14, 0], sizes = [4, 128], strides = [1, 1]} : vector<24x128xf32> to vector<4x128xf32>
    %c12_269 = arith.constant 12 : index
    %c384_270 = arith.constant 384 : index
    %173 = vector.load %arg13[%c12_269, %c384_270] : memref<16x640xf32, #tpu.memory_space<vmem>>, vector<4x128xf32>
    tpu.vector_store %arg13[%c12_269, %c384_270], %172 {strides = array<i32>} : memref<16x640xf32, #tpu.memory_space<vmem>>, vector<4x128xf32>,
    %174 = vector.extract_strided_slice %135 {offsets = [20, 0], sizes = [4, 128], strides = [1, 1]} : vector<24x128xf32> to vector<4x128xf32>
    %c12_271 = arith.constant 12 : index
    %c512_272 = arith.constant 512 : index
    %175 = vector.load %arg13[%c12_271, %c512_272] : memref<16x640xf32, #tpu.memory_space<vmem>>, vector<4x128xf32>
    tpu.vector_store %arg13[%c12_271, %c512_272], %174 {strides = array<i32>} : memref<16x640xf32, #tpu.memory_space<vmem>>, vector<4x128xf32>,
    %c0_273 = arith.constant 0 : index
    %c0_274 = arith.constant 0 : index
    %176 = vector.load %arg13[%c0_273, %c0_274] : memref<16x640xf32, #tpu.memory_space<vmem>>, vector<16x640xf32>
    %c0_275 = arith.constant 0 : index
    %c0_276 = arith.constant 0 : index
    %177 = vector.load %arg3[%c0_275, %c0_276] : memref<640x256xf32, #tpu.memory_space<vmem>>, vector<640x256xf32>
    %cst_277 = arith.constant dense<0.000000e+00> : vector<16x256xf32>
    %178 = tpu.matmul %176, %177, %cst_277 {dimension_numbers = #tpu.dot_dimension_numbers<[1], [0], [0], [1], [0, 0, 1, 1], [], []>} : vector<16x640xf32>, vector<640x256xf32>, vector<16x256xf32> -> vector<16x256xf32>
    %c0_278 = arith.constant 0 : index
    %c0_279 = arith.constant 0 : index
    %179 = vector.load %arg4[%c0_278, %c0_279] : memref<1x256xf32, #tpu.memory_space<vmem>>, vector<1x256xf32>
    %180 = vector.broadcast %179 : vector<1x256xf32> to vector<16x256xf32>
    %181 = arith.addf %178, %180 : vector<16x256xf32>
    %cst_280 = arith.constant 0.000000e+00 : f32
    %182 = vector.broadcast %cst_280 : f32 to vector<16x256xf32>
    %183 = arith.maximumf %181, %182 : vector<16x256xf32>
    %184 = vector.extract_strided_slice %183 {offsets = [0, 0], sizes = [8, 256], strides = [1, 1]} : vector<16x256xf32> to vector<8x256xf32>
    %185 = vector.extract_strided_slice %183 {offsets = [8, 0], sizes = [8, 256], strides = [1, 1]} : vector<16x256xf32> to vector<8x256xf32>
    %186 = arith.maximumf %184, %185 : vector<8x256xf32>
    %187 = vector.extract_strided_slice %186 {offsets = [0, 0], sizes = [8, 128], strides = [1, 1]} : vector<8x256xf32> to vector<8x128xf32>
    %188 = vector.extract_strided_slice %186 {offsets = [0, 128], sizes = [8, 128], strides = [1, 1]} : vector<8x256xf32> to vector<8x128xf32>
    %189 = arith.maximumf %187, %188 : vector<8x128xf32>
    %190 = vector.extract_strided_slice %189 {offsets = [0, 0], sizes = [1, 128], strides = [1, 1]} : vector<8x128xf32> to vector<1x128xf32>
    %c0_281 = arith.constant 0 : index
    %c0_282 = arith.constant 0 : index
    %191 = vector.load %arg14[%c0_281, %c0_282] : memref<2x512xf32, #tpu.memory_space<vmem>>, vector<1x128xf32>
    tpu.vector_store %arg14[%c0_281, %c0_282], %190 {strides = array<i32>} : memref<2x512xf32, #tpu.memory_space<vmem>>, vector<1x128xf32>,
    %192 = vector.extract_strided_slice %189 {offsets = [1, 0], sizes = [1, 128], strides = [1, 1]} : vector<8x128xf32> to vector<1x128xf32>
    %c0_283 = arith.constant 0 : index
    %c128_284 = arith.constant 128 : index
    %193 = vector.load %arg14[%c0_283, %c128_284] : memref<2x512xf32, #tpu.memory_space<vmem>>, vector<1x128xf32>
    tpu.vector_store %arg14[%c0_283, %c128_284], %192 {strides = array<i32>} : memref<2x512xf32, #tpu.memory_space<vmem>>, vector<1x128xf32>,
    %194 = vector.extract_strided_slice %189 {offsets = [2, 0], sizes = [1, 128], strides = [1, 1]} : vector<8x128xf32> to vector<1x128xf32>
    %c0_285 = arith.constant 0 : index
    %c256_286 = arith.constant 256 : index
    %195 = vector.load %arg14[%c0_285, %c256_286] : memref<2x512xf32, #tpu.memory_space<vmem>>, vector<1x128xf32>
    tpu.vector_store %arg14[%c0_285, %c256_286], %194 {strides = array<i32>} : memref<2x512xf32, #tpu.memory_space<vmem>>, vector<1x128xf32>,
    %196 = vector.extract_strided_slice %189 {offsets = [3, 0], sizes = [1, 128], strides = [1, 1]} : vector<8x128xf32> to vector<1x128xf32>
    %c0_287 = arith.constant 0 : index
    %c384_288 = arith.constant 384 : index
    %197 = vector.load %arg14[%c0_287, %c384_288] : memref<2x512xf32, #tpu.memory_space<vmem>>, vector<1x128xf32>
    tpu.vector_store %arg14[%c0_287, %c384_288], %196 {strides = array<i32>} : memref<2x512xf32, #tpu.memory_space<vmem>>, vector<1x128xf32>,
    %198 = vector.extract_strided_slice %189 {offsets = [4, 0], sizes = [1, 128], strides = [1, 1]} : vector<8x128xf32> to vector<1x128xf32>
    %c1_289 = arith.constant 1 : index
    %c0_290 = arith.constant 0 : index
    %199 = vector.load %arg14[%c1_289, %c0_290] : memref<2x512xf32, #tpu.memory_space<vmem>>, vector<1x128xf32>
    tpu.vector_store %arg14[%c1_289, %c0_290], %198 {strides = array<i32>} : memref<2x512xf32, #tpu.memory_space<vmem>>, vector<1x128xf32>,
    %200 = vector.extract_strided_slice %189 {offsets = [5, 0], sizes = [1, 128], strides = [1, 1]} : vector<8x128xf32> to vector<1x128xf32>
    %c1_291 = arith.constant 1 : index
    %c128_292 = arith.constant 128 : index
    %201 = vector.load %arg14[%c1_291, %c128_292] : memref<2x512xf32, #tpu.memory_space<vmem>>, vector<1x128xf32>
    tpu.vector_store %arg14[%c1_291, %c128_292], %200 {strides = array<i32>} : memref<2x512xf32, #tpu.memory_space<vmem>>, vector<1x128xf32>,
    %202 = vector.extract_strided_slice %189 {offsets = [6, 0], sizes = [1, 128], strides = [1, 1]} : vector<8x128xf32> to vector<1x128xf32>
    %c1_293 = arith.constant 1 : index
    %c256_294 = arith.constant 256 : index
    %203 = vector.load %arg14[%c1_293, %c256_294] : memref<2x512xf32, #tpu.memory_space<vmem>>, vector<1x128xf32>
    tpu.vector_store %arg14[%c1_293, %c256_294], %202 {strides = array<i32>} : memref<2x512xf32, #tpu.memory_space<vmem>>, vector<1x128xf32>,
    %204 = vector.extract_strided_slice %189 {offsets = [7, 0], sizes = [1, 128], strides = [1, 1]} : vector<8x128xf32> to vector<1x128xf32>
    %c1_295 = arith.constant 1 : index
    %c384_296 = arith.constant 384 : index
    %205 = vector.load %arg14[%c1_295, %c384_296] : memref<2x512xf32, #tpu.memory_space<vmem>>, vector<1x128xf32>
    tpu.vector_store %arg14[%c1_295, %c384_296], %204 {strides = array<i32>} : memref<2x512xf32, #tpu.memory_space<vmem>>, vector<1x128xf32>,
    %c0_297 = arith.constant 0 : index
    %c0_298 = arith.constant 0 : index
    %206 = vector.load %arg14[%c0_297, %c0_298] : memref<2x512xf32, #tpu.memory_space<vmem>>, vector<2x512xf32>
    %c0_299 = arith.constant 0 : index
    %c0_300 = arith.constant 0 : index
    %207 = vector.load %arg5[%c0_299, %c0_300] : memref<512x120xf32, #tpu.memory_space<vmem>>, vector<512x120xf32>
    %cst_301 = arith.constant dense<0.000000e+00> : vector<2x120xf32>
    %208 = tpu.matmul %206, %207, %cst_301 {dimension_numbers = #tpu.dot_dimension_numbers<[1], [0], [0], [1], [0, 0, 1, 1], [], []>} : vector<2x512xf32>, vector<512x120xf32>, vector<2x120xf32> -> vector<2x120xf32>
    %c0_302 = arith.constant 0 : index
    %c0_303 = arith.constant 0 : index
    %209 = vector.load %arg6[%c0_302, %c0_303] : memref<1x120xf32, #tpu.memory_space<vmem>>, vector<1x120xf32>
    %210 = vector.broadcast %209 : vector<1x120xf32> to vector<2x120xf32>
    %211 = arith.addf %208, %210 : vector<2x120xf32>
    %cst_304 = arith.constant 0.000000e+00 : f32
    %212 = vector.broadcast %cst_304 : f32 to vector<2x120xf32>
    %213 = arith.maximumf %211, %212 : vector<2x120xf32>
    %c0_305 = arith.constant 0 : index
    %c0_306 = arith.constant 0 : index
    %214 = vector.load %arg7[%c0_305, %c0_306] : memref<120x84xf32, #tpu.memory_space<vmem>>, vector<120x84xf32>
    %cst_307 = arith.constant dense<0.000000e+00> : vector<2x84xf32>
    %215 = tpu.matmul %213, %214, %cst_307 {dimension_numbers = #tpu.dot_dimension_numbers<[1], [0], [0], [1], [0, 0, 1, 1], [], []>} : vector<2x120xf32>, vector<120x84xf32>, vector<2x84xf32> -> vector<2x84xf32>
    %c0_308 = arith.constant 0 : index
    %c0_309 = arith.constant 0 : index
    %216 = vector.load %arg8[%c0_308, %c0_309] : memref<1x84xf32, #tpu.memory_space<vmem>>, vector<1x84xf32>
    %217 = vector.broadcast %216 : vector<1x84xf32> to vector<2x84xf32>
    %218 = arith.addf %215, %217 : vector<2x84xf32>
    %cst_310 = arith.constant 0.000000e+00 : f32
    %219 = vector.broadcast %cst_310 : f32 to vector<2x84xf32>
    %220 = arith.maximumf %218, %219 : vector<2x84xf32>
    %c0_311 = arith.constant 0 : index
    %c0_312 = arith.constant 0 : index
    %221 = vector.load %arg9[%c0_311, %c0_312] : memref<84x2xf32, #tpu.memory_space<vmem>>, vector<84x2xf32>
    %cst_313 = arith.constant dense<0.000000e+00> : vector<2x2xf32>
    %222 = tpu.matmul %220, %221, %cst_313 {dimension_numbers = #tpu.dot_dimension_numbers<[1], [0], [0], [1], [0, 0, 1, 1], [], []>} : vector<2x84xf32>, vector<84x2xf32>, vector<2x2xf32> -> vector<2x2xf32>
    %c0_314 = arith.constant 0 : index
    %c0_315 = arith.constant 0 : index
    %223 = vector.load %arg10[%c0_314, %c0_315] : memref<1x2xf32, #tpu.memory_space<vmem>>, vector<1x2xf32>
    %224 = vector.broadcast %223 : vector<1x2xf32> to vector<2x2xf32>
    %225 = arith.addf %222, %224 : vector<2x2xf32>
    %cst_316 = arith.constant 0.000000e+00 : f32
    %226 = vector.broadcast %cst_316 : f32 to vector<2x2xf32>
    %227 = arith.maximumf %225, %226 : vector<2x2xf32>
    %c0_317 = arith.constant 0 : index
    %c0_318 = arith.constant 0 : index
    %228 = vector.load %arg11[%c0_317, %c0_318] : memref<2x2xf32, #tpu.memory_space<vmem>>, vector<2x2xf32>
    tpu.vector_store %arg11[%c0_317, %c0_318], %227 {strides = array<i32>} : memref<2x2xf32, #tpu.memory_space<vmem>>, vector<2x2xf32>,
    return
  }
}

</mosaic_0001>

<llo_original>
// kernel: lenet_forward.1
$region0: #{lenet_forward.1}
  #allocation0 [shape = 'u32[]', space=smem, size = 0x4, offset = 0x4, fixed_abs, tag = 'smem constant byte address 0x4 - core index']
  #allocation1 [shape = 'u32[144,128]{1,0:T(1,128)}', space=vmem, size = 0x12000, scoped, tag = 'internal scratch']
  #allocation2 [shape = 'f32[48,640]{1,0:T(8,128)}', space=vmem, size = 0x1e000, scoped, tag = 'scratch operand']
  #allocation3 [shape = 'f32[16,640]{1,0:T(8,128)}', space=vmem, size = 0xa000, scoped, tag = 'scratch operand']
  #allocation4 [shape = 'f32[2,512]{1,0:T(2,128)}', space=vmem, size = 0x1000, scoped, tag = 'scratch operand']
  %s0 = inlined_call_operand.vmem [shape: f32[4,2,7,28], index: 0, kind: input, shape index: {}]
  %s1 = inlined_call_operand.vmem [shape: f32[640,256], index: 1, kind: input, shape index: {}]
  %s2 = inlined_call_operand.vmem [shape: f32[1,256], index: 2, kind: input, shape index: {}]
  %s3 = inlined_call_operand.hbm [shape: f32[640,256], index: 3, kind: input, shape index: {}]
  %s4 = inlined_call_operand.vmem [shape: f32[1,256], index: 4, kind: input, shape index: {}]
  %s5 = inlined_call_operand.vmem [shape: f32[512,120], index: 5, kind: input, shape index: {}]
  %s6 = inlined_call_operand.vmem [shape: f32[1,120], index: 6, kind: input, shape index: {}]
  %s7 = inlined_call_operand.vmem [shape: f32[120,84], index: 7, kind: input, shape index: {}]
  %s8 = inlined_call_operand.vmem [shape: f32[1,84], index: 8, kind: input, shape index: {}]
  %s9 = inlined_call_operand.vmem [shape: f32[84,2], index: 9, kind: input, shape index: {}]
  %s10 = inlined_call_operand.vmem [shape: f32[1,2], index: 10, kind: input, shape index: {}]
  %s11 = inlined_call_operand.hbm [shape: f32[2,2], index: 11, kind: output, shape index: {}]
  %s12 = sld [smem:[#allocation0]]
  $region58: #{lenet_forward.1} parent=0
    _
  %s14 = ssub.s32 1, %s12
  %s15 = scalar_select 0, %s14, %s12
  $region1: #{lenet_forward.1} parent=0
    #allocation5 [shape = 'u8[655360]{0}', space=vmem, size = 0xa0000, scoped, tag = 'input window, operand 3, single buffered']
    #allocation6 [shape = 's32[1]{0}', space=sflag, size = 0x4, scoped, tag = 'scoped memory for lenet_forward.1']
    #allocation7 [shape = 's32[1]{0}', space=sflag, size = 0x4, scoped, tag = 'scoped memory for lenet_forward.1']
    #allocation8 [shape = 'u8[1024]{0}', space=vmem, size = 0x400, scoped, tag = 'output window, operand 0, single buffered']
    %16 = vsyncpa [#allocation6], 0
    %17 = vsyncpa [#allocation7], 0
    // Predicated region
    $region2: #{lenet_forward.1} parent=1 // pred_check
      _
    $region3: #{lenet_forward.1} parent=1 // pred_check_branch
      %19 = sbr.rel (0) target = $region5
    $region4: #{lenet_forward.1} parent=1 // pred_region
      _
    $region5: #{lenet_forward.1} parent=1 // pred_fallthru
      _
    // Predicated region
    $region6: #{lenet_forward.1} parent=1 // pred_check
      _
    $region7: #{lenet_forward.1} parent=1 // pred_check_branch
      %21 = sbr.rel (0) target = $region9
    $region8: #{lenet_forward.1} parent=1 // pred_region
      _
    $region9: #{lenet_forward.1} parent=1 // pred_fallthru
      _
    // Predicated region
    $region10: #{lenet_forward.1} parent=1 // pred_check
      _
    $region11: #{lenet_forward.1} parent=1 // pred_check_branch
      %23 = sbr.rel (0) target = $region13
    $region12: #{lenet_forward.1} parent=1 // pred_region
      _
    $region13: #{lenet_forward.1} parent=1 // pred_fallthru
      _
    // Predicated region
    $region14: #{lenet_forward.1} parent=1 // pred_check
      _
    $region15: #{lenet_forward.1} parent=1 // pred_check_branch
      %25 = sbr.rel (0) target = $region17
    $region16: #{lenet_forward.1} parent=1 // pred_region
      %s27 = ssub.s32 20480, 20480
      %28 = vsyncadd [#allocation6], %s27
      %s29 = sshll.u32 [#allocation5], 4
      %s30 = int_to_ptr.vmem [resolvable:$true] %s29
      %35 = dma.hbm_to_vmem [thread:$0]  %s3, 20480, %s30, [#allocation6], 256, 256, 16
    $region17: #{lenet_forward.1} parent=1 // pred_fallthru
      _
    // Predicated region
    $region18: #{lenet_forward.1} parent=1 // pred_check
      _
    $region19: #{lenet_forward.1} parent=1 // pred_check_branch
      %37 = sbr.rel (0) target = $region21
    $region20: #{lenet_forward.1} parent=1 // pred_region
      _
    $region21: #{lenet_forward.1} parent=1 // pred_fallthru
      _
    // Predicated region
    $region22: #{lenet_forward.1} parent=1 // pred_check
      _
    $region23: #{lenet_forward.1} parent=1 // pred_check_branch
      %39 = sbr.rel (0) target = $region25
    $region24: #{lenet_forward.1} parent=1 // pred_region
      _
    $region25: #{lenet_forward.1} parent=1 // pred_fallthru
      _
    // Predicated region
    $region26: #{lenet_forward.1} parent=1 // pred_check
      _
    $region27: #{lenet_forward.1} parent=1 // pred_check_branch
      %41 = sbr.rel (0) target = $region29
    $region28: #{lenet_forward.1} parent=1 // pred_region
      _
    $region29: #{lenet_forward.1} parent=1 // pred_fallthru
      _
    // Predicated region
    $region30: #{lenet_forward.1} parent=1 // pred_check
      _
    $region31: #{lenet_forward.1} parent=1 // pred_check_branch
      %43 = sbr.rel (0) target = $region33
    $region32: #{lenet_forward.1} parent=1 // pred_region
      _
    $region33: #{lenet_forward.1} parent=1 // pred_fallthru
      _
    // Predicated region
    $region34: #{lenet_forward.1} parent=1 // pred_check
      _
    $region35: #{lenet_forward.1} parent=1 // pred_check_branch
      %45 = sbr.rel (0) target = $region37
    $region36: #{lenet_forward.1} parent=1 // pred_region
      _
    $region37: #{lenet_forward.1} parent=1 // pred_fallthru
      _
    // Predicated region
    $region38: #{lenet_forward.1} parent=1 // pred_check
      _
    $region39: #{lenet_forward.1} parent=1 // pred_check_branch
      %47 = sbr.rel (0) target = $region41
    $region40: #{lenet_forward.1} parent=1 // pred_region
      _
    $region41: #{lenet_forward.1} parent=1 // pred_fallthru
      _
    // Predicated region
    $region42: #{lenet_forward.1} parent=1 // pred_check
      _
    $region43: #{lenet_forward.1} parent=1 // pred_check_branch
      %49 = sbr.rel (0) target = $region45
    $region44: #{lenet_forward.1} parent=1 // pred_region
      _
    $region45: #{lenet_forward.1} parent=1 // pred_fallthru
      _
    // Predicated region
    $region46: #{lenet_forward.1} parent=1 // pred_check
      _
    $region47: #{lenet_forward.1} parent=1 // pred_check_branch
      %51 = sbr.rel (0) target = $region49
    $region48: #{lenet_forward.1} parent=1 // pred_region
      %52 = dma.done [#allocation6], 20480
    $region49: #{lenet_forward.1} parent=1 // pred_fallthru
      _
    %53 = vst [vmem:[#allocation2] sm:$0xff] 0.0
    %54 = vst [vmem:[#allocation2 + $0x8] sm:$0xff] 0.0
    %55 = vst [vmem:[#allocation2 + $0x10] sm:$0xff] 0.0
    %56 = vst [vmem:[#allocation2 + $0x18] sm:$0xff] 0.0
    %57 = vst [vmem:[#allocation2 + $0x20] sm:$0xff] 0.0
    %58 = vst [vmem:[#allocation2 + $0x28] sm:$0xff] 0.0
    %59 = vst [vmem:[#allocation2 + $0x30] sm:$0xff] 0.0
    %60 = vst [vmem:[#allocation2 + $0x38] sm:$0xff] 0.0
    %61 = vst [vmem:[#allocation2 + $0x40] sm:$0xff] 0.0
    %62 = vst [vmem:[#allocation2 + $0x48] sm:$0xff] 0.0
    %63 = vst [vmem:[#allocation2 + $0x50] sm:$0xff] 0.0
    %64 = vst [vmem:[#allocation2 + $0x58] sm:$0xff] 0.0
    %65 = vst [vmem:[#allocation2 + $0x60] sm:$0xff] 0.0
    %66 = vst [vmem:[#allocation2 + $0x68] sm:$0xff] 0.0
    %67 = vst [vmem:[#allocation2 + $0x70] sm:$0xff] 0.0
    %68 = vst [vmem:[#allocation2 + $0x78] sm:$0xff] 0.0
    %69 = vst [vmem:[#allocation2 + $0x80] sm:$0xff] 0.0
    %70 = vst [vmem:[#allocation2 + $0x88] sm:$0xff] 0.0
    %71 = vst [vmem:[#allocation2 + $0x90] sm:$0xff] 0.0
    %72 = vst [vmem:[#allocation2 + $0x98] sm:$0xff] 0.0
    %73 = vst [vmem:[#allocation2 + $0xa0] sm:$0xff] 0.0
    %74 = vst [vmem:[#allocation2 + $0xa8] sm:$0xff] 0.0
    %75 = vst [vmem:[#allocation2 + $0xb0] sm:$0xff] 0.0
    %76 = vst [vmem:[#allocation2 + $0xb8] sm:$0xff] 0.0
    %77 = vst [vmem:[#allocation2 + $0xc0] sm:$0xff] 0.0
    %78 = vst [vmem:[#allocation2 + $0xc8] sm:$0xff] 0.0
    %79 = vst [vmem:[#allocation2 + $0xd0] sm:$0xff] 0.0
    %80 = vst [vmem:[#allocation2 + $0xd8] sm:$0xff] 0.0
    %81 = vst [vmem:[#allocation2 + $0xe0] sm:$0xff] 0.0
    %82 = vst [vmem:[#allocation2 + $0xe8] sm:$0xff] 0.0
    %v83 = vld [vmem:[%s0] sm:$0x3f]
    %vm84 = vcmask 226304
    %85 = vst.msk [vmem:[#allocation2] sm:$0x3f] %vm84, %v83
    %s86 = scalar_lea.vmem %s0, 16
    %v87 = vld [vmem:[%s86] sm:$0x3f]
    %88 = vst.msk [vmem:[#allocation2 + $0x8] sm:$0x3f] %vm84, %v87
    %s89 = scalar_lea.vmem %s0, 32
    %v90 = vld [vmem:[%s89] sm:$0x3f]
    %91 = vst.msk [vmem:[#allocation2 + $0x10] sm:$0x3f] %vm84, %v90
    %s92 = scalar_lea.vmem %s0, 48
    %v93 = vld [vmem:[%s92] sm:$0x3f]
    %94 = vst.msk [vmem:[#allocation2 + $0x18] sm:$0x3f] %vm84, %v93
    %v95 = vld [vmem:[%s0 + $0x1] sm:$0x3f]
    %96 = vst.msk [vmem:[#allocation2 + $0x20] sm:$0x3f] %vm84, %v95
    %v97 = vld [vmem:[%s89] sm:$0x3f]
    %v99 = vrot.slane %v97, 2
    %vm101 = vcmask 228358
    %102 = vst.msk [vmem:[#allocation2] sm:$0xc0] %vm101, %v99
    %vm103 = vcmask 224256
    %104 = vst.msk [vmem:[#allocation2 + $0x28] sm:$0xf] %vm103, %v99
    %v105 = vld [vmem:[%s92] sm:$0x3f]
    %v107 = vrot.slane %v105, 2
    %109 = vst.msk [vmem:[#allocation2 + $0x8] sm:$0xc0] %vm101, %v107
    %110 = vst.msk [vmem:[#allocation2 + $0x30] sm:$0xf] %vm103, %v107
    %v111 = vld [vmem:[%s0 + $0x1] sm:$0x3f]
    %v113 = vrot.slane %v111, 2
    %115 = vst.msk [vmem:[#allocation2 + $0x10] sm:$0xc0] %vm101, %v113
    %116 = vst.msk [vmem:[#allocation2 + $0x38] sm:$0xf] %vm103, %v113
    %v117 = vld [vmem:[%s86 + $0x1] sm:$0x3f]
    %v119 = vrot.slane %v117, 2
    %121 = vst.msk [vmem:[#allocation2 + $0x18] sm:$0xc0] %vm101, %v119
    %122 = vst.msk [vmem:[#allocation2 + $0x40] sm:$0xf] %vm103, %v119
    %v123 = vld [vmem:[%s89 + $0x1] sm:$0x3f]
    %v125 = vrot.slane %v123, 2
    %127 = vst.msk [vmem:[#allocation2 + $0x20] sm:$0xc0] %vm101, %v125
    %128 = vst.msk [vmem:[#allocation2 + $0x48] sm:$0xf] %vm103, %v125
    %s129 = scalar_lea.vmem %s0, 8
    %v130 = vld [vmem:[%s129] sm:$0x3f]
    %v132 = vrot.slane %v130, 4
    %vm134 = vcmask 228356
    %135 = vst.msk [vmem:[#allocation2 + $0x28] sm:$0xf0] %vm134, %v132
    %vm136 = vcmask 222208
    %137 = vst.msk [vmem:[#allocation2 + $0x50] sm:$0x3] %vm136, %v132
    %s138 = scalar_lea.vmem %s0, 24
    %v139 = vld [vmem:[%s138] sm:$0x3f]
    %v141 = vrot.slane %v139, 4
    %143 = vst.msk [vmem:[#allocation2 + $0x30] sm:$0xf0] %vm134, %v141
    %144 = vst.msk [vmem:[#allocation2 + $0x58] sm:$0x3] %vm136, %v141
    %s145 = scalar_lea.vmem %s0, 40
    %v146 = vld [vmem:[%s145] sm:$0x3f]
    %v148 = vrot.slane %v146, 4
    %150 = vst.msk [vmem:[#allocation2 + $0x38] sm:$0xf0] %vm134, %v148
    %151 = vst.msk [vmem:[#allocation2 + $0x60] sm:$0x3] %vm136, %v148
    %s152 = scalar_lea.vmem %s0, 56
    %v153 = vld [vmem:[%s152] sm:$0x3f]
    %v155 = vrot.slane %v153, 4
    %157 = vst.msk [vmem:[#allocation2 + $0x40] sm:$0xf0] %vm134, %v155
    %158 = vst.msk [vmem:[#allocation2 + $0x68] sm:$0x3] %vm136, %v155
    %v159 = vld [vmem:[%s129 + $0x1] sm:$0x3f]
    %v161 = vrot.slane %v159, 4
    %163 = vst.msk [vmem:[#allocation2 + $0x48] sm:$0xf0] %vm134, %v161
    %164 = vst.msk [vmem:[#allocation2 + $0x70] sm:$0x3] %vm136, %v161
    %v165 = vld [vmem:[%s145] sm:$0x3f]
    %v167 = vrot.slane %v165, 6
    %vm169 = vcmask 228354
    %170 = vst.msk [vmem:[#allocation2 + $0x50] sm:$0xfc] %vm169, %v167
    %v171 = vld [vmem:[%s152] sm:$0x3f]
    %v173 = vrot.slane %v171, 6
    %175 = vst.msk [vmem:[#allocation2 + $0x58] sm:$0xfc] %vm169, %v173
    %v176 = vld [vmem:[%s129 + $0x1] sm:$0x3f]
    %v178 = vrot.slane %v176, 6
    %180 = vst.msk [vmem:[#allocation2 + $0x60] sm:$0xfc] %vm169, %v178
    %v181 = vld [vmem:[%s138 + $0x1] sm:$0x3f]
    %v183 = vrot.slane %v181, 6
    %185 = vst.msk [vmem:[#allocation2 + $0x68] sm:$0xfc] %vm169, %v183
    %v186 = vld [vmem:[%s145 + $0x1] sm:$0x3f]
    %v188 = vrot.slane %v186, 6
    %190 = vst.msk [vmem:[#allocation2 + $0x70] sm:$0xfc] %vm169, %v188
    %v191 = vld [vmem:[%s86] sm:$0x3f]
    %192 = vst.msk [vmem:[#allocation2 + $0x78] sm:$0x3f] %vm84, %v191
    %v193 = vld [vmem:[%s89] sm:$0x3f]
    %194 = vst.msk [vmem:[#allocation2 + $0x80] sm:$0x3f] %vm84, %v193
    %v195 = vld [vmem:[%s92] sm:$0x3f]
    %196 = vst.msk [vmem:[#allocation2 + $0x88] sm:$0x3f] %vm84, %v195
    %v197 = vld [vmem:[%s0 + $0x1] sm:$0x3f]
    %198 = vst.msk [vmem:[#allocation2 + $0x90] sm:$0x3f] %vm84, %v197
    %v199 = vld [vmem:[%s86 + $0x1] sm:$0x3f]
    %200 = vst.msk [vmem:[#allocation2 + $0x98] sm:$0x3f] %vm84, %v199
    %v201 = vld [vmem:[%s92] sm:$0x3f]
    %v203 = vrot.slane %v201, 2
    %205 = vst.msk [vmem:[#allocation2 + $0x78] sm:$0xc0] %vm101, %v203
    %206 = vst.msk [vmem:[#allocation2 + $0xa0] sm:$0xf] %vm103, %v203
    %v207 = vld [vmem:[%s0 + $0x1] sm:$0x3f]
    %v209 = vrot.slane %v207, 2
    %211 = vst.msk [vmem:[#allocation2 + $0x80] sm:$0xc0] %vm101, %v209
    %212 = vst.msk [vmem:[#allocation2 + $0xa8] sm:$0xf] %vm103, %v209
    %v213 = vld [vmem:[%s86 + $0x1] sm:$0x3f]
    %v215 = vrot.slane %v213, 2
    %217 = vst.msk [vmem:[#allocation2 + $0x88] sm:$0xc0] %vm101, %v215
    %218 = vst.msk [vmem:[#allocation2 + $0xb0] sm:$0xf] %vm103, %v215
    %v219 = vld [vmem:[%s89 + $0x1] sm:$0x3f]
    %v221 = vrot.slane %v219, 2
    %223 = vst.msk [vmem:[#allocation2 + $0x90] sm:$0xc0] %vm101, %v221
    %224 = vst.msk [vmem:[#allocation2 + $0xb8] sm:$0xf] %vm103, %v221
    %v225 = vld [vmem:[%s92 + $0x1] sm:$0x3f]
    %v227 = vrot.slane %v225, 2
    %229 = vst.msk [vmem:[#allocation2 + $0x98] sm:$0xc0] %vm101, %v227
    %230 = vst.msk [vmem:[#allocation2 + $0xc0] sm:$0xf] %vm103, %v227
    %v231 = vld [vmem:[%s138] sm:$0x3f]
    %v233 = vrot.slane %v231, 4
    %235 = vst.msk [vmem:[#allocation2 + $0xa0] sm:$0xf0] %vm134, %v233
    %236 = vst.msk [vmem:[#allocation2 + $0xc8] sm:$0x3] %vm136, %v233
    %v237 = vld [vmem:[%s145] sm:$0x3f]
    %v239 = vrot.slane %v237, 4
    %241 = vst.msk [vmem:[#allocation2 + $0xa8] sm:$0xf0] %vm134, %v239
    %242 = vst.msk [vmem:[#allocation2 + $0xd0] sm:$0x3] %vm136, %v239
    %v243 = vld [vmem:[%s152] sm:$0x3f]
    %v245 = vrot.slane %v243, 4
    %247 = vst.msk [vmem:[#allocation2 + $0xb0] sm:$0xf0] %vm134, %v245
    %248 = vst.msk [vmem:[#allocation2 + $0xd8] sm:$0x3] %vm136, %v245
    %v249 = vld [vmem:[%s129 + $0x1] sm:$0x3f]
    %v251 = vrot.slane %v249, 4
    %253 = vst.msk [vmem:[#allocation2 + $0xb8] sm:$0xf0] %vm134, %v251
    %254 = vst.msk [vmem:[#allocation2 + $0xe0] sm:$0x3] %vm136, %v251
    %v255 = vld [vmem:[%s138 + $0x1] sm:$0x3f]
    %v257 = vrot.slane %v255, 4
    %259 = vst.msk [vmem:[#allocation2 + $0xc0] sm:$0xf0] %vm134, %v257
    %260 = vst.msk [vmem:[#allocation2 + $0xe8] sm:$0x3] %vm136, %v257
    %v261 = vld [vmem:[%s152] sm:$0x3f]
    %v263 = vrot.slane %v261, 6
    %265 = vst.msk [vmem:[#allocation2 + $0xc8] sm:$0xfc] %vm169, %v263
    %v266 = vld [vmem:[%s129 + $0x1] sm:$0x3f]
    %v268 = vrot.slane %v266, 6
    %270 = vst.msk [vmem:[#allocation2 + $0xd0] sm:$0xfc] %vm169, %v268
    %v271 = vld [vmem:[%s138 + $0x1] sm:$0x3f]
    %v273 = vrot.slane %v271, 6
    %275 = vst.msk [vmem:[#allocation2 + $0xd8] sm:$0xfc] %vm169, %v273
    %v276 = vld [vmem:[%s145 + $0x1] sm:$0x3f]
    %v278 = vrot.slane %v276, 6
    %280 = vst.msk [vmem:[#allocation2 + $0xe0] sm:$0xfc] %vm169, %v278
    %v281 = vld [vmem:[%s152 + $0x1] sm:$0x3f]
    %v283 = vrot.slane %v281, 6
    %285 = vst.msk [vmem:[#allocation2 + $0xe8] sm:$0xfc] %vm169, %v283
    %v286 = vld [vmem:[#allocation2] sm:$0xff]
    %v287 = vld [vmem:[#allocation2 + $0x8] sm:$0xff]
    %v288 = vld [vmem:[#allocation2 + $0x10] sm:$0xff]
    %v289 = vld [vmem:[#allocation2 + $0x18] sm:$0xff]
    %v290 = vld [vmem:[#allocation2 + $0x20] sm:$0xff]
    %v291 = vld [vmem:[#allocation2 + $0x28] sm:$0xff]
    %v292 = vld [vmem:[#allocation2 + $0x30] sm:$0xff]
    %v293 = vld [vmem:[#allocation2 + $0x38] sm:$0xff]
    %v294 = vld [vmem:[#allocation2 + $0x40] sm:$0xff]
    %v295 = vld [vmem:[#allocation2 + $0x48] sm:$0xff]
    %v296 = vld [vmem:[#allocation2 + $0x50] sm:$0xff]
    %v297 = vld [vmem:[#allocation2 + $0x58] sm:$0xff]
    %v298 = vld [vmem:[#allocation2 + $0x60] sm:$0xff]
    %v299 = vld [vmem:[#allocation2 + $0x68] sm:$0xff]
    %v300 = vld [vmem:[#allocation2 + $0x70] sm:$0xff]
    %v301 = vld [vmem:[#allocation2 + $0x78] sm:$0xff]
    %v302 = vld [vmem:[#allocation2 + $0x80] sm:$0xff]
    %v303 = vld [vmem:[#allocation2 + $0x88] sm:$0xff]
    %v304 = vld [vmem:[#allocation2 + $0x90] sm:$0xff]
    %v305 = vld [vmem:[#allocation2 + $0x98] sm:$0xff]
    %v306 = vld [vmem:[#allocation2 + $0xa0] sm:$0xff]
    %v307 = vld [vmem:[#allocation2 + $0xa8] sm:$0xff]
    %v308 = vld [vmem:[#allocation2 + $0xb0] sm:$0xff]
    %v309 = vld [vmem:[#allocation2 + $0xb8] sm:$0xff]
    %v310 = vld [vmem:[#allocation2 + $0xc0] sm:$0xff]
    %v311 = vld [vmem:[#allocation2 + $0xc8] sm:$0xff]
    %v312 = vld [vmem:[#allocation2 + $0xd0] sm:$0xff]
    %v313 = vld [vmem:[#allocation2 + $0xd8] sm:$0xff]
    %v314 = vld [vmem:[#allocation2 + $0xe0] sm:$0xff]
    %v315 = vld [vmem:[#allocation2 + $0xe8] sm:$0xff]
    %v316 = vld [vmem:[%s1] sm:$0xff]
    %v317 = vld [vmem:[%s1 + $0x8] sm:$0xff]
    %v318 = vld [vmem:[%s1 + $0x10] sm:$0xff]
    %v319 = vld [vmem:[%s1 + $0x18] sm:$0xff]
    %v320 = vld [vmem:[%s1 + $0x20] sm:$0xff]
    %v321 = vld [vmem:[%s1 + $0x28] sm:$0xff]
    %v322 = vld [vmem:[%s1 + $0x30] sm:$0xff]
    %v323 = vld [vmem:[%s1 + $0x38] sm:$0xff]
    %v324 = vld [vmem:[%s1 + $0x40] sm:$0xff]
    %v325 = vld [vmem:[%s1 + $0x48] sm:$0xff]
    %v326 = vld [vmem:[%s1 + $0x50] sm:$0xff]
    %v327 = vld [vmem:[%s1 + $0x58] sm:$0xff]
    %v328 = vld [vmem:[%s1 + $0x60] sm:$0xff]
    %v329 = vld [vmem:[%s1 + $0x68] sm:$0xff]
    %v330 = vld [vmem:[%s1 + $0x70] sm:$0xff]
    %v331 = vld [vmem:[%s1 + $0x78] sm:$0xff]
    %v332 = vld [vmem:[%s1 + $0x80] sm:$0xff]
    %v333 = vld [vmem:[%s1 + $0x88] sm:$0xff]
    %v334 = vld [vmem:[%s1 + $0x90] sm:$0xff]
    %v335 = vld [vmem:[%s1 + $0x98] sm:$0xff]
    %v336 = vld [vmem:[%s1 + $0xa0] sm:$0xff]
    %v337 = vld [vmem:[%s1 + $0xa8] sm:$0xff]
    %v338 = vld [vmem:[%s1 + $0xb0] sm:$0xff]
    %v339 = vld [vmem:[%s1 + $0xb8] sm:$0xff]
    %v340 = vld [vmem:[%s1 + $0xc0] sm:$0xff]
    %v341 = vld [vmem:[%s1 + $0xc8] sm:$0xff]
    %v342 = vld [vmem:[%s1 + $0xd0] sm:$0xff]
    %v343 = vld [vmem:[%s1 + $0xd8] sm:$0xff]
    %v344 = vld [vmem:[%s1 + $0xe0] sm:$0xff]
    %v345 = vld [vmem:[%s1 + $0xe8] sm:$0xff]
    %v346 = vld [vmem:[%s1 + $0xf0] sm:$0xff]
    %v347 = vld [vmem:[%s1 + $0xf8] sm:$0xff]
    %v348 = vld [vmem:[%s1 + $0x100] sm:$0xff]
    %v349 = vld [vmem:[%s1 + $0x108] sm:$0xff]
    %v350 = vld [vmem:[%s1 + $0x110] sm:$0xff]
    %v351 = vld [vmem:[%s1 + $0x118] sm:$0xff]
    %v352 = vld [vmem:[%s1 + $0x120] sm:$0xff]
    %v353 = vld [vmem:[%s1 + $0x128] sm:$0xff]
    %v354 = vld [vmem:[%s1 + $0x130] sm:$0xff]
    %v355 = vld [vmem:[%s1 + $0x138] sm:$0xff]
    %v356 = vld [vmem:[%s1 + $0x140] sm:$0xff]
    %v357 = vld [vmem:[%s1 + $0x148] sm:$0xff]
    %v358 = vld [vmem:[%s1 + $0x150] sm:$0xff]
    %v359 = vld [vmem:[%s1 + $0x158] sm:$0xff]
    %v360 = vld [vmem:[%s1 + $0x160] sm:$0xff]
    %v361 = vld [vmem:[%s1 + $0x168] sm:$0xff]
    %v362 = vld [vmem:[%s1 + $0x170] sm:$0xff]
    %v363 = vld [vmem:[%s1 + $0x178] sm:$0xff]
    %v364 = vld [vmem:[%s1 + $0x180] sm:$0xff]
    %v365 = vld [vmem:[%s1 + $0x188] sm:$0xff]
    %v366 = vld [vmem:[%s1 + $0x190] sm:$0xff]
    %v367 = vld [vmem:[%s1 + $0x198] sm:$0xff]
    %v368 = vld [vmem:[%s1 + $0x1a0] sm:$0xff]
    %v369 = vld [vmem:[%s1 + $0x1a8] sm:$0xff]
    %v370 = vld [vmem:[%s1 + $0x1b0] sm:$0xff]
    %v371 = vld [vmem:[%s1 + $0x1b8] sm:$0xff]
    %v372 = vld [vmem:[%s1 + $0x1c0] sm:$0xff]
    %v373 = vld [vmem:[%s1 + $0x1c8] sm:$0xff]
    %v374 = vld [vmem:[%s1 + $0x1d0] sm:$0xff]
    %v375 = vld [vmem:[%s1 + $0x1d8] sm:$0xff]
    %v376 = vld [vmem:[%s1 + $0x1e0] sm:$0xff]
    %v377 = vld [vmem:[%s1 + $0x1e8] sm:$0xff]
    %v378 = vld [vmem:[%s1 + $0x1f0] sm:$0xff]
    %v379 = vld [vmem:[%s1 + $0x1f8] sm:$0xff]
    %v380 = vld [vmem:[%s1 + $0x200] sm:$0xff]
    %v381 = vld [vmem:[%s1 + $0x208] sm:$0xff]
    %v382 = vld [vmem:[%s1 + $0x210] sm:$0xff]
    %v383 = vld [vmem:[%s1 + $0x218] sm:$0xff]
    %v384 = vld [vmem:[%s1 + $0x220] sm:$0xff]
    %v385 = vld [vmem:[%s1 + $0x228] sm:$0xff]
    %v386 = vld [vmem:[%s1 + $0x230] sm:$0xff]
    %v387 = vld [vmem:[%s1 + $0x238] sm:$0xff]
    %v388 = vld [vmem:[%s1 + $0x240] sm:$0xff]
    %v389 = vld [vmem:[%s1 + $0x248] sm:$0xff]
    %v390 = vld [vmem:[%s1 + $0x250] sm:$0xff]
    %v391 = vld [vmem:[%s1 + $0x258] sm:$0xff]
    %v392 = vld [vmem:[%s1 + $0x260] sm:$0xff]
    %v393 = vld [vmem:[%s1 + $0x268] sm:$0xff]
    %v394 = vld [vmem:[%s1 + $0x270] sm:$0xff]
    %v395 = vld [vmem:[%s1 + $0x278] sm:$0xff]
    %v396 = vld [vmem:[%s1 + $0x280] sm:$0xff]
    %v397 = vld [vmem:[%s1 + $0x288] sm:$0xff]
    %v398 = vld [vmem:[%s1 + $0x290] sm:$0xff]
    %v399 = vld [vmem:[%s1 + $0x298] sm:$0xff]
    %v400 = vld [vmem:[%s1 + $0x2a0] sm:$0xff]
    %v401 = vld [vmem:[%s1 + $0x2a8] sm:$0xff]
    %v402 = vld [vmem:[%s1 + $0x2b0] sm:$0xff]
    %v403 = vld [vmem:[%s1 + $0x2b8] sm:$0xff]
    %v404 = vld [vmem:[%s1 + $0x2c0] sm:$0xff]
    %v405 = vld [vmem:[%s1 + $0x2c8] sm:$0xff]
    %v406 = vld [vmem:[%s1 + $0x2d0] sm:$0xff]
    %v407 = vld [vmem:[%s1 + $0x2d8] sm:$0xff]
    %v408 = vld [vmem:[%s1 + $0x2e0] sm:$0xff]
    %v409 = vld [vmem:[%s1 + $0x2e8] sm:$0xff]
    %v410 = vld [vmem:[%s1 + $0x2f0] sm:$0xff]
    %v411 = vld [vmem:[%s1 + $0x2f8] sm:$0xff]
    %v412 = vld [vmem:[%s1 + $0x300] sm:$0xff]
    %v413 = vld [vmem:[%s1 + $0x308] sm:$0xff]
    %v414 = vld [vmem:[%s1 + $0x310] sm:$0xff]
    %v415 = vld [vmem:[%s1 + $0x318] sm:$0xff]
    %v416 = vld [vmem:[%s1 + $0x320] sm:$0xff]
    %v417 = vld [vmem:[%s1 + $0x328] sm:$0xff]
    %v418 = vld [vmem:[%s1 + $0x330] sm:$0xff]
    %v419 = vld [vmem:[%s1 + $0x338] sm:$0xff]
    %v420 = vld [vmem:[%s1 + $0x340] sm:$0xff]
    %v421 = vld [vmem:[%s1 + $0x348] sm:$0xff]
    %v422 = vld [vmem:[%s1 + $0x350] sm:$0xff]
    %v423 = vld [vmem:[%s1 + $0x358] sm:$0xff]
    %v424 = vld [vmem:[%s1 + $0x360] sm:$0xff]
    %v425 = vld [vmem:[%s1 + $0x368] sm:$0xff]
    %v426 = vld [vmem:[%s1 + $0x370] sm:$0xff]
    %v427 = vld [vmem:[%s1 + $0x378] sm:$0xff]
    %v428 = vld [vmem:[%s1 + $0x380] sm:$0xff]
    %v429 = vld [vmem:[%s1 + $0x388] sm:$0xff]
    %v430 = vld [vmem:[%s1 + $0x390] sm:$0xff]
    %v431 = vld [vmem:[%s1 + $0x398] sm:$0xff]
    %v432 = vld [vmem:[%s1 + $0x3a0] sm:$0xff]
    %v433 = vld [vmem:[%s1 + $0x3a8] sm:$0xff]
    %v434 = vld [vmem:[%s1 + $0x3b0] sm:$0xff]
    %v435 = vld [vmem:[%s1 + $0x3b8] sm:$0xff]
    %v436 = vld [vmem:[%s1 + $0x3c0] sm:$0xff]
    %v437 = vld [vmem:[%s1 + $0x3c8] sm:$0xff]
    %v438 = vld [vmem:[%s1 + $0x3d0] sm:$0xff]
    %v439 = vld [vmem:[%s1 + $0x3d8] sm:$0xff]
    %v440 = vld [vmem:[%s1 + $0x3e0] sm:$0xff]
    %v441 = vld [vmem:[%s1 + $0x3e8] sm:$0xff]
    %v442 = vld [vmem:[%s1 + $0x3f0] sm:$0xff]
    %v443 = vld [vmem:[%s1 + $0x3f8] sm:$0xff]
    %v444 = vld [vmem:[%s1 + $0x400] sm:$0xff]
    %v445 = vld [vmem:[%s1 + $0x408] sm:$0xff]
    %v446 = vld [vmem:[%s1 + $0x410] sm:$0xff]
    %v447 = vld [vmem:[%s1 + $0x418] sm:$0xff]
    %v448 = vld [vmem:[%s1 + $0x420] sm:$0xff]
    %v449 = vld [vmem:[%s1 + $0x428] sm:$0xff]
    %v450 = vld [vmem:[%s1 + $0x430] sm:$0xff]
    %v451 = vld [vmem:[%s1 + $0x438] sm:$0xff]
    %v452 = vld [vmem:[%s1 + $0x440] sm:$0xff]
    %v453 = vld [vmem:[%s1 + $0x448] sm:$0xff]
    %v454 = vld [vmem:[%s1 + $0x450] sm:$0xff]
    %v455 = vld [vmem:[%s1 + $0x458] sm:$0xff]
    %v456 = vld [vmem:[%s1 + $0x460] sm:$0xff]
    %v457 = vld [vmem:[%s1 + $0x468] sm:$0xff]
    %v458 = vld [vmem:[%s1 + $0x470] sm:$0xff]
    %v459 = vld [vmem:[%s1 + $0x478] sm:$0xff]
    %v460 = vld [vmem:[%s1 + $0x480] sm:$0xff]
    %v461 = vld [vmem:[%s1 + $0x488] sm:$0xff]
    %v462 = vld [vmem:[%s1 + $0x490] sm:$0xff]
    %v463 = vld [vmem:[%s1 + $0x498] sm:$0xff]
    %v464 = vld [vmem:[%s1 + $0x4a0] sm:$0xff]
    %v465 = vld [vmem:[%s1 + $0x4a8] sm:$0xff]
    %v466 = vld [vmem:[%s1 + $0x4b0] sm:$0xff]
    %v467 = vld [vmem:[%s1 + $0x4b8] sm:$0xff]
    %v468 = vld [vmem:[%s1 + $0x4c0] sm:$0xff]
    %v469 = vld [vmem:[%s1 + $0x4c8] sm:$0xff]
    %v470 = vld [vmem:[%s1 + $0x4d0] sm:$0xff]
    %v471 = vld [vmem:[%s1 + $0x4d8] sm:$0xff]
    %v472 = vld [vmem:[%s1 + $0x4e0] sm:$0xff]
    %v473 = vld [vmem:[%s1 + $0x4e8] sm:$0xff]
    %v474 = vld [vmem:[%s1 + $0x4f0] sm:$0xff]
    %v475 = vld [vmem:[%s1 + $0x4f8] sm:$0xff]
    %v476 = vld [vmem:[%s2] sm:$0x3]
    %v478 = vlaneseq
    %v479 = vshrl.u32 %v478, 7
    %v480 = vsub.s32 0, %v479
    %v481 = vrot.slane %v476, %v480
    %v482 = vlaneseq
    %v483 = vshrl.u32 %v482, 7
    %v484 = vsub.s32 1, %v483
    %v485 = vrot.slane %v476, %v484
    %488 = vmatprep.subr.mxu0 %v317
    %489 = vmatpush1.msra.mxu0 %v316
    %490 = vmatprep.subr.mxu0 %v319
    %491 = vmatpush1.msra.mxu0 %v318
    %492 = vmatprep.subr.mxu0 %v321
    %493 = vmatpush1.msra.mxu0 %v320
    %494 = vmatprep.subr.mxu0 %v323
    %495 = vmatpush1.msra.mxu0 %v322
    %496 = vmatprep.subr.mxu0 %v325
    %497 = vmatpush1.msra.mxu0 %v324
    %498 = vmatprep.subr.mxu0 %v327
    %499 = vmatpush1.msra.mxu0 %v326
    %500 = vmatprep.subr.mxu0 %v329
    %501 = vmatpush1.msra.mxu0 %v328
    %502 = vmatprep.subr.mxu0 %v331
    %503 = vmatpush1.msra.mxu0 %v330
    %504 = vmatprep.subr.mxu0 %v333
    %505 = vmatpush1.msra.mxu0 %v332
    %506 = vmatprep.subr.mxu0 %v335
    %507 = vmatpush1.msra.mxu0 %v334
    %508 = vmatprep.subr.mxu0 %v337
    %509 = vmatpush1.msra.mxu0 %v336
    %510 = vmatprep.subr.mxu0 %v339
    %511 = vmatpush1.msra.mxu0 %v338
    %512 = vmatprep.subr.mxu0 %v341
    %513 = vmatpush1.msra.mxu0 %v340
    %514 = vmatprep.subr.mxu0 %v343
    %515 = vmatpush1.msra.mxu0 %v342
    %516 = vmatprep.subr.mxu0 %v345
    %517 = vmatpush1.msra.mxu0 %v344
    %518 = vmatprep.subr.mxu0 %v347
    %519 = vmatpush1.msra.mxu0 %v346
    %520 = vmatprep.subr.mxu0 %v349
    %521 = vmatpush1.msra.mxu0 %v348
    %522 = vmatprep.subr.mxu0 %v351
    %523 = vmatpush1.msra.mxu0 %v350
    %524 = vmatprep.subr.mxu0 %v353
    %525 = vmatpush1.msra.mxu0 %v352
    %526 = vmatprep.subr.mxu0 %v355
    %527 = vmatpush1.msra.mxu0 %v354
    %528 = vmatprep.subr.mxu0 %v357
    %529 = vmatpush1.msra.mxu0 %v356
    %530 = vmatprep.subr.mxu0 %v359
    %531 = vmatpush1.msra.mxu0 %v358
    %532 = vmatprep.subr.mxu0 %v361
    %533 = vmatpush1.msra.mxu0 %v360
    %534 = vmatprep.subr.mxu0 %v363
    %535 = vmatpush1.msra.mxu0 %v362
    %536 = vmatprep.subr.mxu0 %v365
    %537 = vmatpush1.msra.mxu0 %v364
    %538 = vmatprep.subr.mxu0 %v367
    %539 = vmatpush1.msra.mxu0 %v366
    %540 = vmatprep.subr.mxu0 %v369
    %541 = vmatpush1.msra.mxu0 %v368
    %542 = vmatprep.subr.mxu0 %v371
    %543 = vmatpush1.msra.mxu0 %v370
    %544 = vmatprep.subr.mxu0 %v373
    %545 = vmatpush1.msra.mxu0 %v372
    %546 = vmatprep.subr.mxu0 %v375
    %547 = vmatpush1.msra.mxu0 %v374
    %548 = vmatprep.subr.mxu0 %v377
    %549 = vmatpush1.msra.mxu0 %v376
    %550 = vmatprep.subr.mxu0 %v379
    %551 = vmatpush1.msra.mxu0 %v378
    %552 = vmatprep.mubr.f32.mxu0 %v287
    %553 = vmatmul.mubr.f32.gmra.mrb[0].mxu0 %v286
    %v554 = vpop.f32.mrb[0].mxu0
    %v555 = vadd.f32 %v481, %v554
    %v556 = vpop.f32.mrb[0].mxu0
    %v557 = vadd.f32 %v485, %v556
    %558 = vmatprep.mubr.f32.mxu0 %v292
    %559 = vmatmul.mubr.f32.gmra.mrb[0].mxu0 %v291
    %v560 = vpop.f32.mrb[0].mxu0
    %v561 = vadd.f32 %v481, %v560
    %v562 = vpop.f32.mrb[0].mxu0
    %v563 = vadd.f32 %v485, %v562
    %564 = vmatprep.mubr.f32.mxu0 %v297
    %565 = vmatmul.mubr.f32.gmra.mrb[0].mxu0 %v296
    %v566 = vpop.f32.mrb[0].mxu0
    %v567 = vadd.f32 %v481, %v566
    %v568 = vpop.f32.mrb[0].mxu0
    %v569 = vadd.f32 %v485, %v568
    %570 = vmatprep.mubr.f32.mxu0 %v302
    %571 = vmatmul.mubr.f32.gmra.mrb[0].mxu0 %v301
    %v572 = vpop.f32.mrb[0].mxu0
    %v573 = vadd.f32 %v481, %v572
    %v574 = vpop.f32.mrb[0].mxu0
    %v575 = vadd.f32 %v485, %v574
    %576 = vmatprep.mubr.f32.mxu0 %v307
    %577 = vmatmul.mubr.f32.gmra.mrb[0].mxu0 %v306
    %v578 = vpop.f32.mrb[0].mxu0
    %v579 = vadd.f32 %v481, %v578
    %v580 = vpop.f32.mrb[0].mxu0
    %v581 = vadd.f32 %v485, %v580
    %582 = vmatprep.mubr.f32.mxu0 %v312
    %583 = vmatmul.mubr.f32.gmra.mrb[0].mxu0 %v311
    %v584 = vpop.f32.mrb[0].mxu0
    %v585 = vadd.f32 %v481, %v584
    %v586 = vpop.f32.mrb[0].mxu0
    %v587 = vadd.f32 %v485, %v586
    %588 = vdwg.mxu0
    %589 = vmatprep.subr.mxu0 %v381
    %590 = vmatpush1.msra.mxu0 %v380
    %591 = vmatprep.subr.mxu0 %v383
    %592 = vmatpush1.msra.mxu0 %v382
    %593 = vmatprep.subr.mxu0 %v385
    %594 = vmatpush1.msra.mxu0 %v384
    %595 = vmatprep.subr.mxu0 %v387
    %596 = vmatpush1.msra.mxu0 %v386
    %597 = vmatprep.subr.mxu0 %v389
    %598 = vmatpush1.msra.mxu0 %v388
    %599 = vmatprep.subr.mxu0 %v391
    %600 = vmatpush1.msra.mxu0 %v390
    %601 = vmatprep.subr.mxu0 %v393
    %602 = vmatpush1.msra.mxu0 %v392
    %603 = vmatprep.subr.mxu0 %v395
    %604 = vmatpush1.msra.mxu0 %v394
    %605 = vmatprep.subr.mxu0 %v397
    %606 = vmatpush1.msra.mxu0 %v396
    %607 = vmatprep.subr.mxu0 %v399
    %608 = vmatpush1.msra.mxu0 %v398
    %609 = vmatprep.subr.mxu0 %v401
    %610 = vmatpush1.msra.mxu0 %v400
    %611 = vmatprep.subr.mxu0 %v403
    %612 = vmatpush1.msra.mxu0 %v402
    %613 = vmatprep.subr.mxu0 %v405
    %614 = vmatpush1.msra.mxu0 %v404
    %615 = vmatprep.subr.mxu0 %v407
    %616 = vmatpush1.msra.mxu0 %v406
    %617 = vmatprep.subr.mxu0 %v409
    %618 = vmatpush1.msra.mxu0 %v408
    %619 = vmatprep.subr.mxu0 %v411
    %620 = vmatpush1.msra.mxu0 %v410
    %621 = vmatprep.subr.mxu0 %v413
    %622 = vmatpush1.msra.mxu0 %v412
    %623 = vmatprep.subr.mxu0 %v415
    %624 = vmatpush1.msra.mxu0 %v414
    %625 = vmatprep.subr.mxu0 %v417
    %626 = vmatpush1.msra.mxu0 %v416
    %627 = vmatprep.subr.mxu0 %v419
    %628 = vmatpush1.msra.mxu0 %v418
    %629 = vmatprep.subr.mxu0 %v421
    %630 = vmatpush1.msra.mxu0 %v420
    %631 = vmatprep.subr.mxu0 %v423
    %632 = vmatpush1.msra.mxu0 %v422
    %633 = vmatprep.subr.mxu0 %v425
    %634 = vmatpush1.msra.mxu0 %v424
    %635 = vmatprep.subr.mxu0 %v427
    %636 = vmatpush1.msra.mxu0 %v426
    %637 = vmatprep.subr.mxu0 %v429
    %638 = vmatpush1.msra.mxu0 %v428
    %639 = vmatprep.subr.mxu0 %v431
    %640 = vmatpush1.msra.mxu0 %v430
    %641 = vmatprep.subr.mxu0 %v433
    %642 = vmatpush1.msra.mxu0 %v432
    %643 = vmatprep.subr.mxu0 %v435
    %644 = vmatpush1.msra.mxu0 %v434
    %645 = vmatprep.subr.mxu0 %v437
    %646 = vmatpush1.msra.mxu0 %v436
    %647 = vmatprep.subr.mxu0 %v439
    %648 = vmatpush1.msra.mxu0 %v438
    %649 = vmatprep.subr.mxu0 %v441
    %650 = vmatpush1.msra.mxu0 %v440
    %651 = vmatprep.subr.mxu0 %v443
    %652 = vmatpush1.msra.mxu0 %v442
    %653 = vmatprep.mubr.f32.mxu0 %v289
    %654 = vmatmul.mubr.f32.gmra.mrb[0].mxu0 %v288
    %v655 = vpop.f32.mrb[0].mxu0
    %v656 = vadd.f32 %v555, %v655
    %v657 = vpop.f32.mrb[0].mxu0
    %v658 = vadd.f32 %v557, %v657
    %659 = vmatprep.mubr.f32.mxu0 %v294
    %660 = vmatmul.mubr.f32.gmra.mrb[0].mxu0 %v293
    %v661 = vpop.f32.mrb[0].mxu0
    %v662 = vadd.f32 %v561, %v661
    %v663 = vpop.f32.mrb[0].mxu0
    %v664 = vadd.f32 %v563, %v663
    %665 = vmatprep.mubr.f32.mxu0 %v299
    %666 = vmatmul.mubr.f32.gmra.mrb[0].mxu0 %v298
    %v667 = vpop.f32.mrb[0].mxu0
    %v668 = vadd.f32 %v567, %v667
    %v669 = vpop.f32.mrb[0].mxu0
    %v670 = vadd.f32 %v569, %v669
    %671 = vmatprep.mubr.f32.mxu0 %v304
    %672 = vmatmul.mubr.f32.gmra.mrb[0].mxu0 %v303
    %v673 = vpop.f32.mrb[0].mxu0
    %v674 = vadd.f32 %v573, %v673
    %v675 = vpop.f32.mrb[0].mxu0
    %v676 = vadd.f32 %v575, %v675
    %677 = vmatprep.mubr.f32.mxu0 %v309
    %678 = vmatmul.mubr.f32.gmra.mrb[0].mxu0 %v308
    %v679 = vpop.f32.mrb[0].mxu0
    %v680 = vadd.f32 %v579, %v679
    %v681 = vpop.f32.mrb[0].mxu0
    %v682 = vadd.f32 %v581, %v681
    %683 = vmatprep.mubr.f32.mxu0 %v314
    %684 = vmatmul.mubr.f32.gmra.mrb[0].mxu0 %v313
    %v685 = vpop.f32.mrb[0].mxu0
    %v686 = vadd.f32 %v585, %v685
    %v687 = vpop.f32.mrb[0].mxu0
    %v688 = vadd.f32 %v587, %v687
    %689 = vdwg.mxu0
    %690 = vmatprep.subr.mxu0 %v445
    %691 = vmatpush1.msra.mxu0 %v444
    %692 = vmatprep.subr.mxu0 %v447
    %693 = vmatpush1.msra.mxu0 %v446
    %694 = vmatprep.subr.mxu0 %v449
    %695 = vmatpush1.msra.mxu0 %v448
    %696 = vmatprep.subr.mxu0 %v451
    %697 = vmatpush1.msra.mxu0 %v450
    %698 = vmatprep.subr.mxu0 %v453
    %699 = vmatpush1.msra.mxu0 %v452
    %700 = vmatprep.subr.mxu0 %v455
    %701 = vmatpush1.msra.mxu0 %v454
    %702 = vmatprep.subr.mxu0 %v457
    %703 = vmatpush1.msra.mxu0 %v456
    %704 = vmatprep.subr.mxu0 %v459
    %705 = vmatpush1.msra.mxu0 %v458
    %706 = vmatprep.subr.mxu0 %v461
    %707 = vmatpush1.msra.mxu0 %v460
    %708 = vmatprep.subr.mxu0 %v463
    %709 = vmatpush1.msra.mxu0 %v462
    %710 = vmatprep.subr.mxu0 %v465
    %711 = vmatpush1.msra.mxu0 %v464
    %712 = vmatprep.subr.mxu0 %v467
    %713 = vmatpush1.msra.mxu0 %v466
    %714 = vmatprep.subr.mxu0 %v469
    %715 = vmatpush1.msra.mxu0 %v468
    %716 = vmatprep.subr.mxu0 %v471
    %717 = vmatpush1.msra.mxu0 %v470
    %718 = vmatprep.subr.mxu0 %v473
    %719 = vmatpush1.msra.mxu0 %v472
    %720 = vmatprep.subr.mxu0 %v475
    %721 = vmatpush1.msra.mxu0 %v474
    %722 = vmatprep.subr.mxu0 0.0
    %723 = vmatpush1.msra.mxu0 0.0
    %724 = vmatprep.subr.mxu0 0.0
    %725 = vmatpush1.msra.mxu0 0.0
    %726 = vmatprep.subr.mxu0 0.0
    %727 = vmatpush1.msra.mxu0 0.0
    %728 = vmatprep.subr.mxu0 0.0
    %729 = vmatpush1.msra.mxu0 0.0
    %730 = vmatprep.subr.mxu0 0.0
    %731 = vmatpush1.msra.mxu0 0.0
    %732 = vmatprep.subr.mxu0 0.0
    %733 = vmatpush1.msra.mxu0 0.0
    %734 = vmatprep.subr.mxu0 0.0
    %735 = vmatpush1.msra.mxu0 0.0
    %736 = vmatprep.subr.mxu0 0.0
    %737 = vmatpush1.msra.mxu0 0.0
    %738 = vmatprep.subr.mxu0 0.0
    %739 = vmatpush1.msra.mxu0 0.0
    %740 = vmatprep.subr.mxu0 0.0
    %741 = vmatpush1.msra.mxu0 0.0
    %742 = vmatprep.subr.mxu0 0.0
    %743 = vmatpush1.msra.mxu0 0.0
    %744 = vmatprep.subr.mxu0 0.0
    %745 = vmatpush1.msra.mxu0 0.0
    %746 = vmatprep.subr.mxu0 0.0
    %747 = vmatpush1.msra.mxu0 0.0
    %748 = vmatprep.subr.mxu0 0.0
    %749 = vmatpush1.msra.mxu0 0.0
    %750 = vmatprep.subr.mxu0 0.0
    %751 = vmatpush1.msra.mxu0 0.0
    %752 = vmatprep.subr.mxu0 0.0
    %753 = vmatpush1.msra.mxu0 0.0
    %754 = vmatprep.mubr.f32.mxu0 0.0
    %755 = vmatmul.mubr.f32.gmra.mrb[0].mxu0 %v290
    %v756 = vpop.f32.mrb[0].mxu0
    %v757 = vadd.f32 %v656, %v756
    %v758 = vpop.f32.mrb[0].mxu0
    %v759 = vadd.f32 %v658, %v758
    %760 = vmatprep.mubr.f32.mxu0 0.0
    %761 = vmatmul.mubr.f32.gmra.mrb[0].mxu0 %v295
    %v762 = vpop.f32.mrb[0].mxu0
    %v763 = vadd.f32 %v662, %v762
    %v764 = vpop.f32.mrb[0].mxu0
    %v765 = vadd.f32 %v664, %v764
    %766 = vmatprep.mubr.f32.mxu0 0.0
    %767 = vmatmul.mubr.f32.gmra.mrb[0].mxu0 %v300
    %v768 = vpop.f32.mrb[0].mxu0
    %v769 = vadd.f32 %v668, %v768
    %v770 = vpop.f32.mrb[0].mxu0
    %v771 = vadd.f32 %v670, %v770
    %772 = vmatprep.mubr.f32.mxu0 0.0
    %773 = vmatmul.mubr.f32.gmra.mrb[0].mxu0 %v305
    %v774 = vpop.f32.mrb[0].mxu0
    %v775 = vadd.f32 %v674, %v774
    %v776 = vpop.f32.mrb[0].mxu0
    %v777 = vadd.f32 %v676, %v776
    %778 = vmatprep.mubr.f32.mxu0 0.0
    %779 = vmatmul.mubr.f32.gmra.mrb[0].mxu0 %v310
    %v780 = vpop.f32.mrb[0].mxu0
    %v781 = vadd.f32 %v680, %v780
    %v782 = vpop.f32.mrb[0].mxu0
    %v783 = vadd.f32 %v682, %v782
    %784 = vmatprep.mubr.f32.mxu0 0.0
    %785 = vmatmul.mubr.f32.gmra.mrb[0].mxu0 %v315
    %v786 = vpop.f32.mrb[0].mxu0
    %v787 = vadd.f32 %v686, %v786
    %v788 = vpop.f32.mrb[0].mxu0
    %v789 = vadd.f32 %v688, %v788
    %790 = vdwg.mxu0
    %v791 = vmax.f32 %v757, 0.0
    %v792 = vmax.f32 %v759, 0.0
    %v793 = vmax.f32 %v763, 0.0
    %v794 = vmax.f32 %v765, 0.0
    %v795 = vmax.f32 %v769, 0.0
    %v796 = vmax.f32 %v771, 0.0
    %v797 = vmax.f32 %v775, 0.0
    %v798 = vmax.f32 %v777, 0.0
    %v799 = vmax.f32 %v781, 0.0
    %v800 = vmax.f32 %v783, 0.0
    %v801 = vmax.f32 %v787, 0.0
    %v802 = vmax.f32 %v789, 0.0
    %v803 = vmax.f32 %v791, %v797
    %v804 = vmax.f32 %v792, %v798
    %v805 = vmax.f32 %v793, %v799
    %v806 = vmax.f32 %v794, %v800
    %v807 = vmax.f32 %v795, %v801
    %v808 = vmax.f32 %v796, %v802
    %v809 = vmax.f32 %v803, %v804
    %v810 = vmax.f32 %v805, %v806
    %v811 = vmax.f32 %v807, %v808
    %812 = vst [vmem:[#allocation3] sm:$0xf] %v809
    %vm815 = vcmask 1041408
    %v816 = vrot.slane %v809, 6
    %v817 = vrot.slane %v810, 6
    %v818 = vsel %vm815, %v816, %v817
    %820 = vst [vmem:[#allocation3 + $0x8] sm:$0xf] %v818
    %v821 = vrot.slane %v809, 1
    %823 = vst [vmem:[#allocation3 + $0x10] sm:$0xf] %v821
    %vm824 = vcmask 1040384
    %v825 = vrot.slane %v809, 7
    %v826 = vrot.slane %v810, 7
    %v827 = vsel %vm824, %v825, %v826
    %829 = vst [vmem:[#allocation3 + $0x18] sm:$0xf] %v827
    %v830 = vrot.slane %v809, 2
    %832 = vst [vmem:[#allocation3 + $0x20] sm:$0xf] %v830
    %833 = vst [vmem:[#allocation3] sm:$0xf0] %v810
    %v835 = vrot.slane %v811, 6
    %837 = vst [vmem:[#allocation3 + $0x8] sm:$0xf0] %v835
    %vm838 = vcmask 1046528
    %v839 = vrot.slane %v810, 1
    %v840 = vrot.slane %v811, 1
    %v841 = vsel %vm838, %v839, %v840
    %843 = vst [vmem:[#allocation3 + $0x10] sm:$0xf0] %v841
    %v844 = vrot.slane %v811, 7
    %846 = vst [vmem:[#allocation3 + $0x18] sm:$0xf0] %v844
    %vm847 = vcmask 1045504
    %v848 = vrot.slane %v810, 2
    %v849 = vrot.slane %v811, 2
    %v850 = vsel %vm847, %v848, %v849
    %852 = vst [vmem:[#allocation3 + $0x20] sm:$0xf0] %v850
    %853 = vst [vmem:[#allocation3 + $0x28] sm:$0xf] %v818
    %854 = vst [vmem:[#allocation3 + $0x30] sm:$0xf] %v821
    %855 = vst [vmem:[#allocation3 + $0x38] sm:$0xf] %v827
    %856 = vst [vmem:[#allocation3 + $0x40] sm:$0xf] %v830
    %857 = vst [vmem:[#allocation3 + $0x48] sm:$0xf] %v810
    %858 = vst [vmem:[#allocation3 + $0x28] sm:$0xf0] %v835
    %859 = vst [vmem:[#allocation3 + $0x30] sm:$0xf0] %v841
    %860 = vst [vmem:[#allocation3 + $0x38] sm:$0xf0] %v844
    %861 = vst [vmem:[#allocation3 + $0x40] sm:$0xf0] %v850
    %862 = vst [vmem:[#allocation3 + $0x48] sm:$0xf0] %v811
    %v863 = vld [vmem:[#allocation3] sm:$0xff]
    %v864 = vld [vmem:[#allocation3 + $0x8] sm:$0xff]
    %v865 = vld [vmem:[#allocation3 + $0x10] sm:$0xff]
    %v866 = vld [vmem:[#allocation3 + $0x18] sm:$0xff]
    %v867 = vld [vmem:[#allocation3 + $0x20] sm:$0xff]
    %v868 = vld [vmem:[#allocation3 + $0x28] sm:$0xff]
    %v869 = vld [vmem:[#allocation3 + $0x30] sm:$0xff]
    %v870 = vld [vmem:[#allocation3 + $0x38] sm:$0xff]
    %v871 = vld [vmem:[#allocation3 + $0x40] sm:$0xff]
    %v872 = vld [vmem:[#allocation3 + $0x48] sm:$0xff]
    %v873 = vld [vmem:[#allocation5] sm:$0xff]
    %v874 = vld [vmem:[#allocation5 + $0x8] sm:$0xff]
    %v875 = vld [vmem:[#allocation5 + $0x10] sm:$0xff]
    %v876 = vld [vmem:[#allocation5 + $0x18] sm:$0xff]
    %v877 = vld [vmem:[#allocation5 + $0x20] sm:$0xff]
    %v878 = vld [vmem:[#allocation5 + $0x28] sm:$0xff]
    %v879 = vld [vmem:[#allocation5 + $0x30] sm:$0xff]
    %v880 = vld [vmem:[#allocation5 + $0x38] sm:$0xff]
    %v881 = vld [vmem:[#allocation5 + $0x40] sm:$0xff]
    %v882 = vld [vmem:[#allocation5 + $0x48] sm:$0xff]
    %v883 = vld [vmem:[#allocation5 + $0x50] sm:$0xff]
    %v884 = vld [vmem:[#allocation5 + $0x58] sm:$0xff]
    %v885 = vld [vmem:[#allocation5 + $0x60] sm:$0xff]
    %v886 = vld [vmem:[#allocation5 + $0x68] sm:$0xff]
    %v887 = vld [vmem:[#allocation5 + $0x70] sm:$0xff]
    %v888 = vld [vmem:[#allocation5 + $0x78] sm:$0xff]
    %v889 = vld [vmem:[#allocation5 + $0x80] sm:$0xff]
    %v890 = vld [vmem:[#allocation5 + $0x88] sm:$0xff]
    %v891 = vld [vmem:[#allocation5 + $0x90] sm:$0xff]
    %v892 = vld [vmem:[#allocation5 + $0x98] sm:$0xff]
    %v893 = vld [vmem:[#allocation5 + $0xa0] sm:$0xff]
    %v894 = vld [vmem:[#allocation5 + $0xa8] sm:$0xff]
    %v895 = vld [vmem:[#allocation5 + $0xb0] sm:$0xff]
    %v896 = vld [vmem:[#allocation5 + $0xb8] sm:$0xff]
    %v897 = vld [vmem:[#allocation5 + $0xc0] sm:$0xff]
    %v898 = vld [vmem:[#allocation5 + $0xc8] sm:$0xff]
    %v899 = vld [vmem:[#allocation5 + $0xd0] sm:$0xff]
    %v900 = vld [vmem:[#allocation5 + $0xd8] sm:$0xff]
    %v901 = vld [vmem:[#allocation5 + $0xe0] sm:$0xff]
    %v902 = vld [vmem:[#allocation5 + $0xe8] sm:$0xff]
    %v903 = vld [vmem:[#allocation5 + $0xf0] sm:$0xff]
    %v904 = vld [vmem:[#allocation5 + $0xf8] sm:$0xff]
    %v905 = vld [vmem:[#allocation5 + $0x100] sm:$0xff]
    %v906 = vld [vmem:[#allocation5 + $0x108] sm:$0xff]
    %v907 = vld [vmem:[#allocation5 + $0x110] sm:$0xff]
    %v908 = vld [vmem:[#allocation5 + $0x118] sm:$0xff]
    %v909 = vld [vmem:[#allocation5 + $0x120] sm:$0xff]
    %v910 = vld [vmem:[#allocation5 + $0x128] sm:$0xff]
    %v911 = vld [vmem:[#allocation5 + $0x130] sm:$0xff]
    %v912 = vld [vmem:[#allocation5 + $0x138] sm:$0xff]
    %v913 = vld [vmem:[#allocation5 + $0x140] sm:$0xff]
    %v914 = vld [vmem:[#allocation5 + $0x148] sm:$0xff]
    %v915 = vld [vmem:[#allocation5 + $0x150] sm:$0xff]
    %v916 = vld [vmem:[#allocation5 + $0x158] sm:$0xff]
    %v917 = vld [vmem:[#allocation5 + $0x160] sm:$0xff]
    %v918 = vld [vmem:[#allocation5 + $0x168] sm:$0xff]
    %v919 = vld [vmem:[#allocation5 + $0x170] sm:$0xff]
    %v920 = vld [vmem:[#allocation5 + $0x178] sm:$0xff]
    %v921 = vld [vmem:[#allocation5 + $0x180] sm:$0xff]
    %v922 = vld [vmem:[#allocation5 + $0x188] sm:$0xff]
    %v923 = vld [vmem:[#allocation5 + $0x190] sm:$0xff]
    %v924 = vld [vmem:[#allocation5 + $0x198] sm:$0xff]
    %v925 = vld [vmem:[#allocation5 + $0x1a0] sm:$0xff]
    %v926 = vld [vmem:[#allocation5 + $0x1a8] sm:$0xff]
    %v927 = vld [vmem:[#allocation5 + $0x1b0] sm:$0xff]
    %v928 = vld [vmem:[#allocation5 + $0x1b8] sm:$0xff]
    %v929 = vld [vmem:[#allocation5 + $0x1c0] sm:$0xff]
    %v930 = vld [vmem:[#allocation5 + $0x1c8] sm:$0xff]
    %v931 = vld [vmem:[#allocation5 + $0x1d0] sm:$0xff]
    %v932 = vld [vmem:[#allocation5 + $0x1d8] sm:$0xff]
    %v933 = vld [vmem:[#allocation5 + $0x1e0] sm:$0xff]
    %v934 = vld [vmem:[#allocation5 + $0x1e8] sm:$0xff]
    %v935 = vld [vmem:[#allocation5 + $0x1f0] sm:$0xff]
    %v936 = vld [vmem:[#allocation5 + $0x1f8] sm:$0xff]
    %v937 = vld [vmem:[#allocation5 + $0x200] sm:$0xff]
    %v938 = vld [vmem:[#allocation5 + $0x208] sm:$0xff]
    %v939 = vld [vmem:[#allocation5 + $0x210] sm:$0xff]
    %v940 = vld [vmem:[#allocation5 + $0x218] sm:$0xff]
    %v941 = vld [vmem:[#allocation5 + $0x220] sm:$0xff]
    %v942 = vld [vmem:[#allocation5 + $0x228] sm:$0xff]
    %v943 = vld [vmem:[#allocation5 + $0x230] sm:$0xff]
    %v944 = vld [vmem:[#allocation5 + $0x238] sm:$0xff]
    %v945 = vld [vmem:[#allocation5 + $0x240] sm:$0xff]
    %v946 = vld [vmem:[#allocation5 + $0x248] sm:$0xff]
    %v947 = vld [vmem:[#allocation5 + $0x250] sm:$0xff]
    %v948 = vld [vmem:[#allocation5 + $0x258] sm:$0xff]
    %v949 = vld [vmem:[#allocation5 + $0x260] sm:$0xff]
    %v950 = vld [vmem:[#allocation5 + $0x268] sm:$0xff]
    %v951 = vld [vmem:[#allocation5 + $0x270] sm:$0xff]
    %v952 = vld [vmem:[#allocation5 + $0x278] sm:$0xff]
    %v953 = vld [vmem:[#allocation5 + $0x280] sm:$0xff]
    %v954 = vld [vmem:[#allocation5 + $0x288] sm:$0xff]
    %v955 = vld [vmem:[#allocation5 + $0x290] sm:$0xff]
    %v956 = vld [vmem:[#allocation5 + $0x298] sm:$0xff]
    %v957 = vld [vmem:[#allocation5 + $0x2a0] sm:$0xff]
    %v958 = vld [vmem:[#allocation5 + $0x2a8] sm:$0xff]
    %v959 = vld [vmem:[#allocation5 + $0x2b0] sm:$0xff]
    %v960 = vld [vmem:[#allocation5 + $0x2b8] sm:$0xff]
    %v961 = vld [vmem:[#allocation5 + $0x2c0] sm:$0xff]
    %v962 = vld [vmem:[#allocation5 + $0x2c8] sm:$0xff]
    %v963 = vld [vmem:[#allocation5 + $0x2d0] sm:$0xff]
    %v964 = vld [vmem:[#allocation5 + $0x2d8] sm:$0xff]
    %v965 = vld [vmem:[#allocation5 + $0x2e0] sm:$0xff]
    %v966 = vld [vmem:[#allocation5 + $0x2e8] sm:$0xff]
    %v967 = vld [vmem:[#allocation5 + $0x2f0] sm:$0xff]
    %v968 = vld [vmem:[#allocation5 + $0x2f8] sm:$0xff]
    %v969 = vld [vmem:[#allocation5 + $0x300] sm:$0xff]
    %v970 = vld [vmem:[#allocation5 + $0x308] sm:$0xff]
    %v971 = vld [vmem:[#allocation5 + $0x310] sm:$0xff]
    %v972 = vld [vmem:[#allocation5 + $0x318] sm:$0xff]
    %v973 = vld [vmem:[#allocation5 + $0x320] sm:$0xff]
    %v974 = vld [vmem:[#allocation5 + $0x328] sm:$0xff]
    %v975 = vld [vmem:[#allocation5 + $0x330] sm:$0xff]
    %v976 = vld [vmem:[#allocation5 + $0x338] sm:$0xff]
    %v977 = vld [vmem:[#allocation5 + $0x340] sm:$0xff]
    %v978 = vld [vmem:[#allocation5 + $0x348] sm:$0xff]
    %v979 = vld [vmem:[#allocation5 + $0x350] sm:$0xff]
    %v980 = vld [vmem:[#allocation5 + $0x358] sm:$0xff]
    %v981 = vld [vmem:[#allocation5 + $0x360] sm:$0xff]
    %v982 = vld [vmem:[#allocation5 + $0x368] sm:$0xff]
    %v983 = vld [vmem:[#allocation5 + $0x370] sm:$0xff]
    %v984 = vld [vmem:[#allocation5 + $0x378] sm:$0xff]
    %v985 = vld [vmem:[#allocation5 + $0x380] sm:$0xff]
    %v986 = vld [vmem:[#allocation5 + $0x388] sm:$0xff]
    %v987 = vld [vmem:[#allocation5 + $0x390] sm:$0xff]
    %v988 = vld [vmem:[#allocation5 + $0x398] sm:$0xff]
    %v989 = vld [vmem:[#allocation5 + $0x3a0] sm:$0xff]
    %v990 = vld [vmem:[#allocation5 + $0x3a8] sm:$0xff]
    %v991 = vld [vmem:[#allocation5 + $0x3b0] sm:$0xff]
    %v992 = vld [vmem:[#allocation5 + $0x3b8] sm:$0xff]
    %v993 = vld [vmem:[#allocation5 + $0x3c0] sm:$0xff]
    %v994 = vld [vmem:[#allocation5 + $0x3c8] sm:$0xff]
    %v995 = vld [vmem:[#allocation5 + $0x3d0] sm:$0xff]
    %v996 = vld [vmem:[#allocation5 + $0x3d8] sm:$0xff]
    %v997 = vld [vmem:[#allocation5 + $0x3e0] sm:$0xff]
    %v998 = vld [vmem:[#allocation5 + $0x3e8] sm:$0xff]
    %v999 = vld [vmem:[#allocation5 + $0x3f0] sm:$0xff]
    %v1000 = vld [vmem:[#allocation5 + $0x3f8] sm:$0xff]
    %v1001 = vld [vmem:[#allocation5 + $0x400] sm:$0xff]
    %v1002 = vld [vmem:[#allocation5 + $0x408] sm:$0xff]
    %v1003 = vld [vmem:[#allocation5 + $0x410] sm:$0xff]
    %v1004 = vld [vmem:[#allocation5 + $0x418] sm:$0xff]
    %v1005 = vld [vmem:[#allocation5 + $0x420] sm:$0xff]
    %v1006 = vld [vmem:[#allocation5 + $0x428] sm:$0xff]
    %v1007 = vld [vmem:[#allocation5 + $0x430] sm:$0xff]
    %v1008 = vld [vmem:[#allocation5 + $0x438] sm:$0xff]
    %v1009 = vld [vmem:[#allocation5 + $0x440] sm:$0xff]
    %v1010 = vld [vmem:[#allocation5 + $0x448] sm:$0xff]
    %v1011 = vld [vmem:[#allocation5 + $0x450] sm:$0xff]
    %v1012 = vld [vmem:[#allocation5 + $0x458] sm:$0xff]
    %v1013 = vld [vmem:[#allocation5 + $0x460] sm:$0xff]
    %v1014 = vld [vmem:[#allocation5 + $0x468] sm:$0xff]
    %v1015 = vld [vmem:[#allocation5 + $0x470] sm:$0xff]
    %v1016 = vld [vmem:[#allocation5 + $0x478] sm:$0xff]
    %v1017 = vld [vmem:[#allocation5 + $0x480] sm:$0xff]
    %v1018 = vld [vmem:[#allocation5 + $0x488] sm:$0xff]
    %v1019 = vld [vmem:[#allocation5 + $0x490] sm:$0xff]
    %v1020 = vld [vmem:[#allocation5 + $0x498] sm:$0xff]
    %v1021 = vld [vmem:[#allocation5 + $0x4a0] sm:$0xff]
    %v1022 = vld [vmem:[#allocation5 + $0x4a8] sm:$0xff]
    %v1023 = vld [vmem:[#allocation5 + $0x4b0] sm:$0xff]
    %v1024 = vld [vmem:[#allocation5 + $0x4b8] sm:$0xff]
    %v1025 = vld [vmem:[#allocation5 + $0x4c0] sm:$0xff]
    %v1026 = vld [vmem:[#allocation5 + $0x4c8] sm:$0xff]
    %v1027 = vld [vmem:[#allocation5 + $0x4d0] sm:$0xff]
    %v1028 = vld [vmem:[#allocation5 + $0x4d8] sm:$0xff]
    %v1029 = vld [vmem:[#allocation5 + $0x4e0] sm:$0xff]
    %v1030 = vld [vmem:[#allocation5 + $0x4e8] sm:$0xff]
    %v1031 = vld [vmem:[#allocation5 + $0x4f0] sm:$0xff]
    %v1032 = vld [vmem:[#allocation5 + $0x4f8] sm:$0xff]
    %v1033 = vld [vmem:[%s4] sm:$0x3]
    %v1035 = vlaneseq
    %v1036 = vshrl.u32 %v1035, 7
    %v1037 = vsub.s32 0, %v1036
    %v1038 = vrot.slane %v1033, %v1037
    %v1039 = vlaneseq
    %v1040 = vshrl.u32 %v1039, 7
    %v1041 = vsub.s32 1, %v1040
    %v1042 = vrot.slane %v1033, %v1041
    %1045 = vmatprep.subr.mxu0 %v874
    %1046 = vmatpush1.msra.mxu0 %v873
    %1047 = vmatprep.subr.mxu0 %v876
    %1048 = vmatpush1.msra.mxu0 %v875
    %1049 = vmatprep.subr.mxu0 %v878
    %1050 = vmatpush1.msra.mxu0 %v877
    %1051 = vmatprep.subr.mxu0 %v880
    %1052 = vmatpush1.msra.mxu0 %v879
    %1053 = vmatprep.subr.mxu0 %v882
    %1054 = vmatpush1.msra.mxu0 %v881
    %1055 = vmatprep.subr.mxu0 %v884
    %1056 = vmatpush1.msra.mxu0 %v883
    %1057 = vmatprep.subr.mxu0 %v886
    %1058 = vmatpush1.msra.mxu0 %v885
    %1059 = vmatprep.subr.mxu0 %v888
    %1060 = vmatpush1.msra.mxu0 %v887
    %1061 = vmatprep.subr.mxu0 %v890
    %1062 = vmatpush1.msra.mxu0 %v889
    %1063 = vmatprep.subr.mxu0 %v892
    %1064 = vmatpush1.msra.mxu0 %v891
    %1065 = vmatprep.subr.mxu0 %v894
    %1066 = vmatpush1.msra.mxu0 %v893
    %1067 = vmatprep.subr.mxu0 %v896
    %1068 = vmatpush1.msra.mxu0 %v895
    %1069 = vmatprep.subr.mxu0 %v898
    %1070 = vmatpush1.msra.mxu0 %v897
    %1071 = vmatprep.subr.mxu0 %v900
    %1072 = vmatpush1.msra.mxu0 %v899
    %1073 = vmatprep.subr.mxu0 %v902
    %1074 = vmatpush1.msra.mxu0 %v901
    %1075 = vmatprep.subr.mxu0 %v904
    %1076 = vmatpush1.msra.mxu0 %v903
    %1077 = vmatprep.subr.mxu0 %v906
    %1078 = vmatpush1.msra.mxu0 %v905
    %1079 = vmatprep.subr.mxu0 %v908
    %1080 = vmatpush1.msra.mxu0 %v907
    %1081 = vmatprep.subr.mxu0 %v910
    %1082 = vmatpush1.msra.mxu0 %v909
    %1083 = vmatprep.subr.mxu0 %v912
    %1084 = vmatpush1.msra.mxu0 %v911
    %1085 = vmatprep.subr.mxu0 %v914
    %1086 = vmatpush1.msra.mxu0 %v913
    %1087 = vmatprep.subr.mxu0 %v916
    %1088 = vmatpush1.msra.mxu0 %v915
    %1089 = vmatprep.subr.mxu0 %v918
    %1090 = vmatpush1.msra.mxu0 %v917
    %1091 = vmatprep.subr.mxu0 %v920
    %1092 = vmatpush1.msra.mxu0 %v919
    %1093 = vmatprep.subr.mxu0 %v922
    %1094 = vmatpush1.msra.mxu0 %v921
    %1095 = vmatprep.subr.mxu0 %v924
    %1096 = vmatpush1.msra.mxu0 %v923
    %1097 = vmatprep.subr.mxu0 %v926
    %1098 = vmatpush1.msra.mxu0 %v925
    %1099 = vmatprep.subr.mxu0 %v928
    %1100 = vmatpush1.msra.mxu0 %v927
    %1101 = vmatprep.subr.mxu0 %v930
    %1102 = vmatpush1.msra.mxu0 %v929
    %1103 = vmatprep.subr.mxu0 %v932
    %1104 = vmatpush1.msra.mxu0 %v931
    %1105 = vmatprep.subr.mxu0 %v934
    %1106 = vmatpush1.msra.mxu0 %v933
    %1107 = vmatprep.subr.mxu0 %v936
    %1108 = vmatpush1.msra.mxu0 %v935
    %1109 = vmatprep.mubr.f32.mxu0 %v864
    %1110 = vmatmul.mubr.f32.gmra.mrb[0].mxu0 %v863
    %v1111 = vpop.f32.mrb[0].mxu0
    %v1112 = vadd.f32 %v1038, %v1111
    %v1113 = vpop.f32.mrb[0].mxu0
    %v1114 = vadd.f32 %v1042, %v1113
    %1115 = vmatprep.mubr.f32.mxu0 %v869
    %1116 = vmatmul.mubr.f32.gmra.mrb[0].mxu0 %v868
    %v1117 = vpop.f32.mrb[0].mxu0
    %v1118 = vadd.f32 %v1038, %v1117
    %v1119 = vpop.f32.mrb[0].mxu0
    %v1120 = vadd.f32 %v1042, %v1119
    %1121 = vdwg.mxu0
    %1122 = vmatprep.subr.mxu0 %v938
    %1123 = vmatpush1.msra.mxu0 %v937
    %1124 = vmatprep.subr.mxu0 %v940
    %1125 = vmatpush1.msra.mxu0 %v939
    %1126 = vmatprep.subr.mxu0 %v942
    %1127 = vmatpush1.msra.mxu0 %v941
    %1128 = vmatprep.subr.mxu0 %v944
    %1129 = vmatpush1.msra.mxu0 %v943
    %1130 = vmatprep.subr.mxu0 %v946
    %1131 = vmatpush1.msra.mxu0 %v945
    %1132 = vmatprep.subr.mxu0 %v948
    %1133 = vmatpush1.msra.mxu0 %v947
    %1134 = vmatprep.subr.mxu0 %v950
    %1135 = vmatpush1.msra.mxu0 %v949
    %1136 = vmatprep.subr.mxu0 %v952
    %1137 = vmatpush1.msra.mxu0 %v951
    %1138 = vmatprep.subr.mxu0 %v954
    %1139 = vmatpush1.msra.mxu0 %v953
    %1140 = vmatprep.subr.mxu0 %v956
    %1141 = vmatpush1.msra.mxu0 %v955
    %1142 = vmatprep.subr.mxu0 %v958
    %1143 = vmatpush1.msra.mxu0 %v957
    %1144 = vmatprep.subr.mxu0 %v960
    %1145 = vmatpush1.msra.mxu0 %v959
    %1146 = vmatprep.subr.mxu0 %v962
    %1147 = vmatpush1.msra.mxu0 %v961
    %1148 = vmatprep.subr.mxu0 %v964
    %1149 = vmatpush1.msra.mxu0 %v963
    %1150 = vmatprep.subr.mxu0 %v966
    %1151 = vmatpush1.msra.mxu0 %v965
    %1152 = vmatprep.subr.mxu0 %v968
    %1153 = vmatpush1.msra.mxu0 %v967
    %1154 = vmatprep.subr.mxu0 %v970
    %1155 = vmatpush1.msra.mxu0 %v969
    %1156 = vmatprep.subr.mxu0 %v972
    %1157 = vmatpush1.msra.mxu0 %v971
    %1158 = vmatprep.subr.mxu0 %v974
    %1159 = vmatpush1.msra.mxu0 %v973
    %1160 = vmatprep.subr.mxu0 %v976
    %1161 = vmatpush1.msra.mxu0 %v975
    %1162 = vmatprep.subr.mxu0 %v978
    %1163 = vmatpush1.msra.mxu0 %v977
    %1164 = vmatprep.subr.mxu0 %v980
    %1165 = vmatpush1.msra.mxu0 %v979
    %1166 = vmatprep.subr.mxu0 %v982
    %1167 = vmatpush1.msra.mxu0 %v981
    %1168 = vmatprep.subr.mxu0 %v984
    %1169 = vmatpush1.msra.mxu0 %v983
    %1170 = vmatprep.subr.mxu0 %v986
    %1171 = vmatpush1.msra.mxu0 %v985
    %1172 = vmatprep.subr.mxu0 %v988
    %1173 = vmatpush1.msra.mxu0 %v987
    %1174 = vmatprep.subr.mxu0 %v990
    %1175 = vmatpush1.msra.mxu0 %v989
    %1176 = vmatprep.subr.mxu0 %v992
    %1177 = vmatpush1.msra.mxu0 %v991
    %1178 = vmatprep.subr.mxu0 %v994
    %1179 = vmatpush1.msra.mxu0 %v993
    %1180 = vmatprep.subr.mxu0 %v996
    %1181 = vmatpush1.msra.mxu0 %v995
    %1182 = vmatprep.subr.mxu0 %v998
    %1183 = vmatpush1.msra.mxu0 %v997
    %1184 = vmatprep.subr.mxu0 %v1000
    %1185 = vmatpush1.msra.mxu0 %v999
    %1186 = vmatprep.mubr.f32.mxu0 %v866
    %1187 = vmatmul.mubr.f32.gmra.mrb[0].mxu0 %v865
    %v1188 = vpop.f32.mrb[0].mxu0
    %v1189 = vadd.f32 %v1112, %v1188
    %v1190 = vpop.f32.mrb[0].mxu0
    %v1191 = vadd.f32 %v1114, %v1190
    %1192 = vmatprep.mubr.f32.mxu0 %v871
    %1193 = vmatmul.mubr.f32.gmra.mrb[0].mxu0 %v870
    %v1194 = vpop.f32.mrb[0].mxu0
    %v1195 = vadd.f32 %v1118, %v1194
    %v1196 = vpop.f32.mrb[0].mxu0
    %v1197 = vadd.f32 %v1120, %v1196
    %1198 = vdwg.mxu0
    %1199 = vmatprep.subr.mxu0 %v1002
    %1200 = vmatpush1.msra.mxu0 %v1001
    %1201 = vmatprep.subr.mxu0 %v1004
    %1202 = vmatpush1.msra.mxu0 %v1003
    %1203 = vmatprep.subr.mxu0 %v1006
    %1204 = vmatpush1.msra.mxu0 %v1005
    %1205 = vmatprep.subr.mxu0 %v1008
    %1206 = vmatpush1.msra.mxu0 %v1007
    %1207 = vmatprep.subr.mxu0 %v1010
    %1208 = vmatpush1.msra.mxu0 %v1009
    %1209 = vmatprep.subr.mxu0 %v1012
    %1210 = vmatpush1.msra.mxu0 %v1011
    %1211 = vmatprep.subr.mxu0 %v1014
    %1212 = vmatpush1.msra.mxu0 %v1013
    %1213 = vmatprep.subr.mxu0 %v1016
    %1214 = vmatpush1.msra.mxu0 %v1015
    %1215 = vmatprep.subr.mxu0 %v1018
    %1216 = vmatpush1.msra.mxu0 %v1017
    %1217 = vmatprep.subr.mxu0 %v1020
    %1218 = vmatpush1.msra.mxu0 %v1019
    %1219 = vmatprep.subr.mxu0 %v1022
    %1220 = vmatpush1.msra.mxu0 %v1021
    %1221 = vmatprep.subr.mxu0 %v1024
    %1222 = vmatpush1.msra.mxu0 %v1023
    %1223 = vmatprep.subr.mxu0 %v1026
    %1224 = vmatpush1.msra.mxu0 %v1025
    %1225 = vmatprep.subr.mxu0 %v1028
    %1226 = vmatpush1.msra.mxu0 %v1027
    %1227 = vmatprep.subr.mxu0 %v1030
    %1228 = vmatpush1.msra.mxu0 %v1029
    %1229 = vmatprep.subr.mxu0 %v1032
    %1230 = vmatpush1.msra.mxu0 %v1031
    %1231 = vmatprep.subr.mxu0 0.0
    %1232 = vmatpush1.msra.mxu0 0.0
    %1233 = vmatprep.subr.mxu0 0.0
    %1234 = vmatpush1.msra.mxu0 0.0
    %1235 = vmatprep.subr.mxu0 0.0
    %1236 = vmatpush1.msra.mxu0 0.0
    %1237 = vmatprep.subr.mxu0 0.0
    %1238 = vmatpush1.msra.mxu0 0.0
    %1239 = vmatprep.subr.mxu0 0.0
    %1240 = vmatpush1.msra.mxu0 0.0
    %1241 = vmatprep.subr.mxu0 0.0
    %1242 = vmatpush1.msra.mxu0 0.0
    %1243 = vmatprep.subr.mxu0 0.0
    %1244 = vmatpush1.msra.mxu0 0.0
    %1245 = vmatprep.subr.mxu0 0.0
    %1246 = vmatpush1.msra.mxu0 0.0
    %1247 = vmatprep.subr.mxu0 0.0
    %1248 = vmatpush1.msra.mxu0 0.0
    %1249 = vmatprep.subr.mxu0 0.0
    %1250 = vmatpush1.msra.mxu0 0.0
    %1251 = vmatprep.subr.mxu0 0.0
    %1252 = vmatpush1.msra.mxu0 0.0
    %1253 = vmatprep.subr.mxu0 0.0
    %1254 = vmatpush1.msra.mxu0 0.0
    %1255 = vmatprep.subr.mxu0 0.0
    %1256 = vmatpush1.msra.mxu0 0.0
    %1257 = vmatprep.subr.mxu0 0.0
    %1258 = vmatpush1.msra.mxu0 0.0
    %1259 = vmatprep.subr.mxu0 0.0
    %1260 = vmatpush1.msra.mxu0 0.0
    %1261 = vmatprep.subr.mxu0 0.0
    %1262 = vmatpush1.msra.mxu0 0.0
    %1263 = vmatprep.mubr.f32.mxu0 0.0
    %1264 = vmatmul.mubr.f32.gmra.mrb[0].mxu0 %v867
    %v1265 = vpop.f32.mrb[0].mxu0
    %v1266 = vadd.f32 %v1189, %v1265
    %v1267 = vpop.f32.mrb[0].mxu0
    %v1268 = vadd.f32 %v1191, %v1267
    %1269 = vmatprep.mubr.f32.mxu0 0.0
    %1270 = vmatmul.mubr.f32.gmra.mrb[0].mxu0 %v872
    %v1271 = vpop.f32.mrb[0].mxu0
    %v1272 = vadd.f32 %v1195, %v1271
    %v1273 = vpop.f32.mrb[0].mxu0
    %v1274 = vadd.f32 %v1197, %v1273
    %1275 = vdwg.mxu0
    %v1276 = vmax.f32 %v1266, 0.0
    %v1277 = vmax.f32 %v1268, 0.0
    %v1278 = vmax.f32 %v1272, 0.0
    %v1279 = vmax.f32 %v1274, 0.0
    %v1280 = vmax.f32 %v1276, %v1278
    %v1281 = vmax.f32 %v1277, %v1279
    %v1282 = vmax.f32 %v1280, %v1281
    %1283 = vst [vmem:[#allocation4] sm:$0x1] %v1282
    %v1286 = vunpack.c.l.s4 1983009808
    %v1287 = vunpack.c.0.s8 %v1286
    %v1288 = vlaneseq
    %v1289 = vshrl.u32 %v1288, 7
    %v1290 = vsub.s32 %v1287, %v1289
    %v1291 = vrot.slane %v1282, %v1290
    %v1292 = vrot.slane %v1291, 7
    %v1293 = vrot.slane %v1292, 2
    %1295 = vst [vmem:[#allocation4 + $0x2] sm:$0x1] %v1293
    %v1296 = vcombine.high %v1291, %v1291
    %1298 = vst [vmem:[#allocation4 + $0x4] sm:$0x1] %v1296
    %v1299 = vrot.slane %v1296, 7
    %v1300 = vrot.slane %v1299, 2
    %1302 = vst [vmem:[#allocation4 + $0x6] sm:$0x1] %v1300
    %v1303 = vcombine.high %v1282, %v1282
    %v1305 = vunpack.c.l.s4 1983009808
    %v1306 = vunpack.c.0.s8 %v1305
    %v1307 = vlaneseq
    %v1308 = vshrl.u32 %v1307, 7
    %v1309 = vsub.s32 %v1306, %v1308
    %v1310 = vrot.slane %v1303, %v1309
    %1312 = vst [vmem:[#allocation4 + $0x1] sm:$0x1] %v1310
    %v1313 = vrot.slane %v1310, 7
    %v1314 = vrot.slane %v1313, 2
    %1316 = vst [vmem:[#allocation4 + $0x3] sm:$0x1] %v1314
    %v1317 = vcombine.high %v1310, %v1310
    %1319 = vst [vmem:[#allocation4 + $0x5] sm:$0x1] %v1317
    %v1320 = vrot.slane %v1317, 7
    %v1321 = vrot.slane %v1320, 2
    %1323 = vst [vmem:[#allocation4 + $0x7] sm:$0x1] %v1321
    %v1324 = vld [vmem:[#allocation4] sm:$0xff]
    %v1325 = vld [vmem:[%s5] sm:$0xff]
    %v1326 = vld [vmem:[%s5 + $0x8] sm:$0xff]
    %v1327 = vld [vmem:[%s5 + $0x10] sm:$0xff]
    %v1328 = vld [vmem:[%s5 + $0x18] sm:$0xff]
    %v1329 = vld [vmem:[%s5 + $0x20] sm:$0xff]
    %v1330 = vld [vmem:[%s5 + $0x28] sm:$0xff]
    %v1331 = vld [vmem:[%s5 + $0x30] sm:$0xff]
    %v1332 = vld [vmem:[%s5 + $0x38] sm:$0xff]
    %v1333 = vld [vmem:[%s5 + $0x40] sm:$0xff]
    %v1334 = vld [vmem:[%s5 + $0x48] sm:$0xff]
    %v1335 = vld [vmem:[%s5 + $0x50] sm:$0xff]
    %v1336 = vld [vmem:[%s5 + $0x58] sm:$0xff]
    %v1337 = vld [vmem:[%s5 + $0x60] sm:$0xff]
    %v1338 = vld [vmem:[%s5 + $0x68] sm:$0xff]
    %v1339 = vld [vmem:[%s5 + $0x70] sm:$0xff]
    %v1340 = vld [vmem:[%s5 + $0x78] sm:$0xff]
    %v1341 = vld [vmem:[%s5 + $0x80] sm:$0xff]
    %v1342 = vld [vmem:[%s5 + $0x88] sm:$0xff]
    %v1343 = vld [vmem:[%s5 + $0x90] sm:$0xff]
    %v1344 = vld [vmem:[%s5 + $0x98] sm:$0xff]
    %v1345 = vld [vmem:[%s5 + $0xa0] sm:$0xff]
    %v1346 = vld [vmem:[%s5 + $0xa8] sm:$0xff]
    %v1347 = vld [vmem:[%s5 + $0xb0] sm:$0xff]
    %v1348 = vld [vmem:[%s5 + $0xb8] sm:$0xff]
    %v1349 = vld [vmem:[%s5 + $0xc0] sm:$0xff]
    %v1350 = vld [vmem:[%s5 + $0xc8] sm:$0xff]
    %v1351 = vld [vmem:[%s5 + $0xd0] sm:$0xff]
    %v1352 = vld [vmem:[%s5 + $0xd8] sm:$0xff]
    %v1353 = vld [vmem:[%s5 + $0xe0] sm:$0xff]
    %v1354 = vld [vmem:[%s5 + $0xe8] sm:$0xff]
    %v1355 = vld [vmem:[%s5 + $0xf0] sm:$0xff]
    %v1356 = vld [vmem:[%s5 + $0xf8] sm:$0xff]
    %v1357 = vld [vmem:[%s5 + $0x100] sm:$0xff]
    %v1358 = vld [vmem:[%s5 + $0x108] sm:$0xff]
    %v1359 = vld [vmem:[%s5 + $0x110] sm:$0xff]
    %v1360 = vld [vmem:[%s5 + $0x118] sm:$0xff]
    %v1361 = vld [vmem:[%s5 + $0x120] sm:$0xff]
    %v1362 = vld [vmem:[%s5 + $0x128] sm:$0xff]
    %v1363 = vld [vmem:[%s5 + $0x130] sm:$0xff]
    %v1364 = vld [vmem:[%s5 + $0x138] sm:$0xff]
    %v1365 = vld [vmem:[%s5 + $0x140] sm:$0xff]
    %v1366 = vld [vmem:[%s5 + $0x148] sm:$0xff]
    %v1367 = vld [vmem:[%s5 + $0x150] sm:$0xff]
    %v1368 = vld [vmem:[%s5 + $0x158] sm:$0xff]
    %v1369 = vld [vmem:[%s5 + $0x160] sm:$0xff]
    %v1370 = vld [vmem:[%s5 + $0x168] sm:$0xff]
    %v1371 = vld [vmem:[%s5 + $0x170] sm:$0xff]
    %v1372 = vld [vmem:[%s5 + $0x178] sm:$0xff]
    %v1373 = vld [vmem:[%s5 + $0x180] sm:$0xff]
    %v1374 = vld [vmem:[%s5 + $0x188] sm:$0xff]
    %v1375 = vld [vmem:[%s5 + $0x190] sm:$0xff]
    %v1376 = vld [vmem:[%s5 + $0x198] sm:$0xff]
    %v1377 = vld [vmem:[%s5 + $0x1a0] sm:$0xff]
    %v1378 = vld [vmem:[%s5 + $0x1a8] sm:$0xff]
    %v1379 = vld [vmem:[%s5 + $0x1b0] sm:$0xff]
    %v1380 = vld [vmem:[%s5 + $0x1b8] sm:$0xff]
    %v1381 = vld [vmem:[%s5 + $0x1c0] sm:$0xff]
    %v1382 = vld [vmem:[%s5 + $0x1c8] sm:$0xff]
    %v1383 = vld [vmem:[%s5 + $0x1d0] sm:$0xff]
    %v1384 = vld [vmem:[%s5 + $0x1d8] sm:$0xff]
    %v1385 = vld [vmem:[%s5 + $0x1e0] sm:$0xff]
    %v1386 = vld [vmem:[%s5 + $0x1e8] sm:$0xff]
    %v1387 = vld [vmem:[%s5 + $0x1f0] sm:$0xff]
    %v1388 = vld [vmem:[%s5 + $0x1f8] sm:$0xff]
    %v1389 = vld [vmem:[%s6] sm:$0x1]
    %v1391 = vlaneseq
    %v1392 = vshrl.u32 %v1391, 7
    %v1393 = vsub.s32 0, %v1392
    %v1394 = vrot.slane %v1389, %v1393
    %v1397 = vcombine.high %v1324, %v1324
    %v1399 = vunpack.c.l.s4 1983009808
    %v1400 = vunpack.c.0.s8 %v1399
    %v1401 = vlaneseq
    %v1402 = vshrl.u32 %v1401, 7
    %v1403 = vsub.s32 %v1400, %v1402
    %v1404 = vrot.slane %v1324, %v1403
    %v1406 = vunpack.c.l.s4 1983009808
    %v1407 = vunpack.c.0.s8 %v1406
    %v1408 = vlaneseq
    %v1409 = vshrl.u32 %v1408, 7
    %v1410 = vsub.s32 %v1407, %v1409
    %v1411 = vrot.slane %v1397, %v1410
    %v1412 = vcombine.high %v1404, %v1404
    %v1413 = vcombine.high %v1411, %v1411
    %1418 = vmatprep.subr.mxu0 0.0
    %1419 = vmatpush1.msra.mxu0 %v1325
    %1420 = vmatprep.subr.mxu0 0.0
    %1421 = vmatpush1.msra.mxu0 %v1326
    %1422 = vmatprep.subr.mxu0 0.0
    %1423 = vmatpush1.msra.mxu0 %v1327
    %1424 = vmatprep.subr.mxu0 0.0
    %1425 = vmatpush1.msra.mxu0 %v1328
    %1426 = vmatprep.subr.mxu0 0.0
    %1427 = vmatpush1.msra.mxu0 %v1329
    %1428 = vmatprep.subr.mxu0 0.0
    %1429 = vmatpush1.msra.mxu0 %v1330
    %1430 = vmatprep.subr.mxu0 0.0
    %1431 = vmatpush1.msra.mxu0 %v1331
    %1432 = vmatprep.subr.mxu0 0.0
    %1433 = vmatpush1.msra.mxu0 %v1332
    %1434 = vmatprep.subr.mxu0 0.0
    %1435 = vmatpush1.msra.mxu0 %v1333
    %1436 = vmatprep.subr.mxu0 0.0
    %1437 = vmatpush1.msra.mxu0 %v1334
    %1438 = vmatprep.subr.mxu0 0.0
    %1439 = vmatpush1.msra.mxu0 %v1335
    %1440 = vmatprep.subr.mxu0 0.0
    %1441 = vmatpush1.msra.mxu0 %v1336
    %1442 = vmatprep.subr.mxu0 0.0
    %1443 = vmatpush1.msra.mxu0 %v1337
    %1444 = vmatprep.subr.mxu0 0.0
    %1445 = vmatpush1.msra.mxu0 %v1338
    %1446 = vmatprep.subr.mxu0 0.0
    %1447 = vmatpush1.msra.mxu0 %v1339
    %1448 = vmatprep.subr.mxu0 0.0
    %1449 = vmatpush1.msra.mxu0 %v1340
    %1450 = vmatprep.subr.mxu0 0.0
    %1451 = vmatpush1.msra.mxu0 %v1341
    %1452 = vmatprep.subr.mxu0 0.0
    %1453 = vmatpush1.msra.mxu0 %v1342
    %1454 = vmatprep.subr.mxu0 0.0
    %1455 = vmatpush1.msra.mxu0 %v1343
    %1456 = vmatprep.subr.mxu0 0.0
    %1457 = vmatpush1.msra.mxu0 %v1344
    %1458 = vmatprep.subr.mxu0 0.0
    %1459 = vmatpush1.msra.mxu0 %v1345
    %1460 = vmatprep.subr.mxu0 0.0
    %1461 = vmatpush1.msra.mxu0 %v1346
    %1462 = vmatprep.subr.mxu0 0.0
    %1463 = vmatpush1.msra.mxu0 %v1347
    %1464 = vmatprep.subr.mxu0 0.0
    %1465 = vmatpush1.msra.mxu0 %v1348
    %1466 = vmatprep.subr.mxu0 0.0
    %1467 = vmatpush1.msra.mxu0 %v1349
    %1468 = vmatprep.subr.mxu0 0.0
    %1469 = vmatpush1.msra.mxu0 %v1350
    %1470 = vmatprep.subr.mxu0 0.0
    %1471 = vmatpush1.msra.mxu0 %v1351
    %1472 = vmatprep.subr.mxu0 0.0
    %1473 = vmatpush1.msra.mxu0 %v1352
    %1474 = vmatprep.subr.mxu0 0.0
    %1475 = vmatpush1.msra.mxu0 %v1353
    %1476 = vmatprep.subr.mxu0 0.0
    %1477 = vmatpush1.msra.mxu0 %v1354
    %1478 = vmatprep.subr.mxu0 0.0
    %1479 = vmatpush1.msra.mxu0 %v1355
    %1480 = vmatprep.subr.mxu0 0.0
    %1481 = vmatpush1.msra.mxu0 %v1356
    %1482 = vmatprep.mubr.f32.mxu0 %v1412
    %1483 = vmatmul.mubr.f32.gmra.mrb[0].mxu0 %v1404
    %v1484 = vpop.f32.mrb[0].mxu0
    %v1485 = vadd.f32 %v1394, %v1484
    %v1486 = vpop.f32.mrb[0].mxu0
    %1487 = vdwg.mxu0
    %1488 = vmatprep.subr.mxu0 0.0
    %1489 = vmatpush1.msra.mxu0 %v1357
    %1490 = vmatprep.subr.mxu0 0.0
    %1491 = vmatpush1.msra.mxu0 %v1358
    %1492 = vmatprep.subr.mxu0 0.0
    %1493 = vmatpush1.msra.mxu0 %v1359
    %1494 = vmatprep.subr.mxu0 0.0
    %1495 = vmatpush1.msra.mxu0 %v1360
    %1496 = vmatprep.subr.mxu0 0.0
    %1497 = vmatpush1.msra.mxu0 %v1361
    %1498 = vmatprep.subr.mxu0 0.0
    %1499 = vmatpush1.msra.mxu0 %v1362
    %1500 = vmatprep.subr.mxu0 0.0
    %1501 = vmatpush1.msra.mxu0 %v1363
    %1502 = vmatprep.subr.mxu0 0.0
    %1503 = vmatpush1.msra.mxu0 %v1364
    %1504 = vmatprep.subr.mxu0 0.0
    %1505 = vmatpush1.msra.mxu0 %v1365
    %1506 = vmatprep.subr.mxu0 0.0
    %1507 = vmatpush1.msra.mxu0 %v1366
    %1508 = vmatprep.subr.mxu0 0.0
    %1509 = vmatpush1.msra.mxu0 %v1367
    %1510 = vmatprep.subr.mxu0 0.0
    %1511 = vmatpush1.msra.mxu0 %v1368
    %1512 = vmatprep.subr.mxu0 0.0
    %1513 = vmatpush1.msra.mxu0 %v1369
    %1514 = vmatprep.subr.mxu0 0.0
    %1515 = vmatpush1.msra.mxu0 %v1370
    %1516 = vmatprep.subr.mxu0 0.0
    %1517 = vmatpush1.msra.mxu0 %v1371
    %1518 = vmatprep.subr.mxu0 0.0
    %1519 = vmatpush1.msra.mxu0 %v1372
    %1520 = vmatprep.subr.mxu0 0.0
    %1521 = vmatpush1.msra.mxu0 %v1373
    %1522 = vmatprep.subr.mxu0 0.0
    %1523 = vmatpush1.msra.mxu0 %v1374
    %1524 = vmatprep.subr.mxu0 0.0
    %1525 = vmatpush1.msra.mxu0 %v1375
    %1526 = vmatprep.subr.mxu0 0.0
    %1527 = vmatpush1.msra.mxu0 %v1376
    %1528 = vmatprep.subr.mxu0 0.0
    %1529 = vmatpush1.msra.mxu0 %v1377
    %1530 = vmatprep.subr.mxu0 0.0
    %1531 = vmatpush1.msra.mxu0 %v1378
    %1532 = vmatprep.subr.mxu0 0.0
    %1533 = vmatpush1.msra.mxu0 %v1379
    %1534 = vmatprep.subr.mxu0 0.0
    %1535 = vmatpush1.msra.mxu0 %v1380
    %1536 = vmatprep.subr.mxu0 0.0
    %1537 = vmatpush1.msra.mxu0 %v1381
    %1538 = vmatprep.subr.mxu0 0.0
    %1539 = vmatpush1.msra.mxu0 %v1382
    %1540 = vmatprep.subr.mxu0 0.0
    %1541 = vmatpush1.msra.mxu0 %v1383
    %1542 = vmatprep.subr.mxu0 0.0
    %1543 = vmatpush1.msra.mxu0 %v1384
    %1544 = vmatprep.subr.mxu0 0.0
    %1545 = vmatpush1.msra.mxu0 %v1385
    %1546 = vmatprep.subr.mxu0 0.0
    %1547 = vmatpush1.msra.mxu0 %v1386
    %1548 = vmatprep.subr.mxu0 0.0
    %1549 = vmatpush1.msra.mxu0 %v1387
    %1550 = vmatprep.subr.mxu0 0.0
    %1551 = vmatpush1.msra.mxu0 %v1388
    %1552 = vmatprep.mubr.f32.mxu0 %v1413
    %1553 = vmatmul.mubr.f32.gmra.mrb[0].mxu0 %v1411
    %v1554 = vpop.f32.mrb[0].mxu0
    %v1555 = vadd.f32 %v1485, %v1554
    %v1556 = vpop.f32.mrb[0].mxu0
    %1557 = vdwg.mxu0
    %v1558 = vmax.f32 %v1555, 0.0
    %v1559 = vld [vmem:[%s7] sm:$0xff]
    %v1560 = vld [vmem:[%s7 + $0x8] sm:$0xff]
    %v1561 = vld [vmem:[%s7 + $0x10] sm:$0xff]
    %v1562 = vld [vmem:[%s7 + $0x18] sm:$0xff]
    %v1563 = vld [vmem:[%s7 + $0x20] sm:$0xff]
    %v1564 = vld [vmem:[%s7 + $0x28] sm:$0xff]
    %v1565 = vld [vmem:[%s7 + $0x30] sm:$0xff]
    %v1566 = vld [vmem:[%s7 + $0x38] sm:$0xff]
    %v1567 = vld [vmem:[%s7 + $0x40] sm:$0xff]
    %v1568 = vld [vmem:[%s7 + $0x48] sm:$0xff]
    %v1569 = vld [vmem:[%s7 + $0x50] sm:$0xff]
    %v1570 = vld [vmem:[%s7 + $0x58] sm:$0xff]
    %v1571 = vld [vmem:[%s7 + $0x60] sm:$0xff]
    %v1572 = vld [vmem:[%s7 + $0x68] sm:$0xff]
    %v1573 = vld [vmem:[%s7 + $0x70] sm:$0xff]
    %v1574 = vld [vmem:[%s8] sm:$0x1]
    %v1576 = vlaneseq
    %v1577 = vshrl.u32 %v1576, 7
    %v1578 = vsub.s32 0, %v1577
    %v1579 = vrot.slane %v1574, %v1578
    %vm1581 = vcmask 982016
    %v1583 = vsel %vm1581, %v1558, 0
    %1585 = vmatprep.subr.mxu0 0.0
    %1586 = vmatpush1.msra.mxu0 %v1559
    %1587 = vmatprep.subr.mxu0 0.0
    %1588 = vmatpush1.msra.mxu0 %v1560
    %1589 = vmatprep.subr.mxu0 0.0
    %1590 = vmatpush1.msra.mxu0 %v1561
    %1591 = vmatprep.subr.mxu0 0.0
    %1592 = vmatpush1.msra.mxu0 %v1562
    %1593 = vmatprep.subr.mxu0 0.0
    %1594 = vmatpush1.msra.mxu0 %v1563
    %1595 = vmatprep.subr.mxu0 0.0
    %1596 = vmatpush1.msra.mxu0 %v1564
    %1597 = vmatprep.subr.mxu0 0.0
    %1598 = vmatpush1.msra.mxu0 %v1565
    %1599 = vmatprep.subr.mxu0 0.0
    %1600 = vmatpush1.msra.mxu0 %v1566
    %1601 = vmatprep.subr.mxu0 0.0
    %1602 = vmatpush1.msra.mxu0 %v1567
    %1603 = vmatprep.subr.mxu0 0.0
    %1604 = vmatpush1.msra.mxu0 %v1568
    %1605 = vmatprep.subr.mxu0 0.0
    %1606 = vmatpush1.msra.mxu0 %v1569
    %1607 = vmatprep.subr.mxu0 0.0
    %1608 = vmatpush1.msra.mxu0 %v1570
    %1609 = vmatprep.subr.mxu0 0.0
    %1610 = vmatpush1.msra.mxu0 %v1571
    %1611 = vmatprep.subr.mxu0 0.0
    %1612 = vmatpush1.msra.mxu0 %v1572
    %1613 = vmatprep.subr.mxu0 0.0
    %1614 = vmatpush1.msra.mxu0 %v1573
    %1615 = vmatprep.subr.mxu0 0.0
    %1616 = vmatpush1.msra.mxu0 0.0
    %1617 = vmatprep.subr.mxu0 0.0
    %1618 = vmatpush1.msra.mxu0 0.0
    %1619 = vmatprep.subr.mxu0 0.0
    %1620 = vmatpush1.msra.mxu0 0.0
    %1621 = vmatprep.subr.mxu0 0.0
    %1622 = vmatpush1.msra.mxu0 0.0
    %1623 = vmatprep.subr.mxu0 0.0
    %1624 = vmatpush1.msra.mxu0 0.0
    %1625 = vmatprep.subr.mxu0 0.0
    %1626 = vmatpush1.msra.mxu0 0.0
    %1627 = vmatprep.subr.mxu0 0.0
    %1628 = vmatpush1.msra.mxu0 0.0
    %1629 = vmatprep.subr.mxu0 0.0
    %1630 = vmatpush1.msra.mxu0 0.0
    %1631 = vmatprep.subr.mxu0 0.0
    %1632 = vmatpush1.msra.mxu0 0.0
    %1633 = vmatprep.subr.mxu0 0.0
    %1634 = vmatpush1.msra.mxu0 0.0
    %1635 = vmatprep.subr.mxu0 0.0
    %1636 = vmatpush1.msra.mxu0 0.0
    %1637 = vmatprep.subr.mxu0 0.0
    %1638 = vmatpush1.msra.mxu0 0.0
    %1639 = vmatprep.subr.mxu0 0.0
    %1640 = vmatpush1.msra.mxu0 0.0
    %1641 = vmatprep.subr.mxu0 0.0
    %1642 = vmatpush1.msra.mxu0 0.0
    %1643 = vmatprep.subr.mxu0 0.0
    %1644 = vmatpush1.msra.mxu0 0.0
    %1645 = vmatprep.subr.mxu0 0.0
    %1646 = vmatpush1.msra.mxu0 0.0
    %1647 = vmatprep.subr.mxu0 0.0
    %1648 = vmatpush1.msra.mxu0 0.0
    %1649 = vmatprep.mubr.f32.mxu0 0.0
    %1650 = vmatmul.mubr.f32.gmra.mrb[0].mxu0 %v1583
    %v1651 = vpop.f32.mrb[0].mxu0
    %v1652 = vadd.f32 %v1579, %v1651
    %v1653 = vpop.f32.mrb[0].mxu0
    %1654 = vdwg.mxu0
    %v1655 = vmax.f32 %v1652, 0.0
    %v1656 = vld [vmem:[%s9] sm:$0xff]
    %v1657 = vld [vmem:[%s9 + $0x8] sm:$0xff]
    %v1658 = vld [vmem:[%s9 + $0x10] sm:$0xff]
    %v1659 = vld [vmem:[%s9 + $0x18] sm:$0xff]
    %v1660 = vld [vmem:[%s9 + $0x20] sm:$0xff]
    %v1661 = vld [vmem:[%s9 + $0x28] sm:$0xff]
    %v1662 = vld [vmem:[%s9 + $0x30] sm:$0xff]
    %v1663 = vld [vmem:[%s9 + $0x38] sm:$0xff]
    %v1664 = vld [vmem:[%s9 + $0x40] sm:$0xff]
    %v1665 = vld [vmem:[%s9 + $0x48] sm:$0xff]
    %v1666 = vld [vmem:[%s9 + $0x50] sm:$0xf]
    %v1667 = vld [vmem:[%s10] sm:$0x1]
    %v1669 = vlaneseq
    %v1670 = vshrl.u32 %v1669, 7
    %v1671 = vsub.s32 0, %v1670
    %v1672 = vrot.slane %v1667, %v1671
    %vm1674 = vcmask 687104
    %v1676 = vsel %vm1674, %v1655, 0
    %vm1678 = vcmask 1043456
    %v1680 = vsel %vm1678, %v1666, 0
    %1682 = vmatprep.subr.mxu0 0.0
    %1683 = vmatpush1.msra.mxu0 %v1656
    %1684 = vmatprep.subr.mxu0 0.0
    %1685 = vmatpush1.msra.mxu0 %v1657
    %1686 = vmatprep.subr.mxu0 0.0
    %1687 = vmatpush1.msra.mxu0 %v1658
    %1688 = vmatprep.subr.mxu0 0.0
    %1689 = vmatpush1.msra.mxu0 %v1659
    %1690 = vmatprep.subr.mxu0 0.0
    %1691 = vmatpush1.msra.mxu0 %v1660
    %1692 = vmatprep.subr.mxu0 0.0
    %1693 = vmatpush1.msra.mxu0 %v1661
    %1694 = vmatprep.subr.mxu0 0.0
    %1695 = vmatpush1.msra.mxu0 %v1662
    %1696 = vmatprep.subr.mxu0 0.0
    %1697 = vmatpush1.msra.mxu0 %v1663
    %1698 = vmatprep.subr.mxu0 0.0
    %1699 = vmatpush1.msra.mxu0 %v1664
    %1700 = vmatprep.subr.mxu0 0.0
    %1701 = vmatpush1.msra.mxu0 %v1665
    %1702 = vmatprep.subr.mxu0 0.0
    %1703 = vmatpush1.msra.mxu0 %v1680
    %1704 = vmatprep.subr.mxu0 0.0
    %1705 = vmatpush1.msra.mxu0 0.0
    %1706 = vmatprep.subr.mxu0 0.0
    %1707 = vmatpush1.msra.mxu0 0.0
    %1708 = vmatprep.subr.mxu0 0.0
    %1709 = vmatpush1.msra.mxu0 0.0
    %1710 = vmatprep.subr.mxu0 0.0
    %1711 = vmatpush1.msra.mxu0 0.0
    %1712 = vmatprep.subr.mxu0 0.0
    %1713 = vmatpush1.msra.mxu0 0.0
    %1714 = vmatprep.subr.mxu0 0.0
    %1715 = vmatpush1.msra.mxu0 0.0
    %1716 = vmatprep.subr.mxu0 0.0
    %1717 = vmatpush1.msra.mxu0 0.0
    %1718 = vmatprep.subr.mxu0 0.0
    %1719 = vmatpush1.msra.mxu0 0.0
    %1720 = vmatprep.subr.mxu0 0.0
    %1721 = vmatpush1.msra.mxu0 0.0
    %1722 = vmatprep.subr.mxu0 0.0
    %1723 = vmatpush1.msra.mxu0 0.0
    %1724 = vmatprep.subr.mxu0 0.0
    %1725 = vmatpush1.msra.mxu0 0.0
    %1726 = vmatprep.subr.mxu0 0.0
    %1727 = vmatpush1.msra.mxu0 0.0
    %1728 = vmatprep.subr.mxu0 0.0
    %1729 = vmatpush1.msra.mxu0 0.0
    %1730 = vmatprep.subr.mxu0 0.0
    %1731 = vmatpush1.msra.mxu0 0.0
    %1732 = vmatprep.subr.mxu0 0.0
    %1733 = vmatpush1.msra.mxu0 0.0
    %1734 = vmatprep.subr.mxu0 0.0
    %1735 = vmatpush1.msra.mxu0 0.0
    %1736 = vmatprep.subr.mxu0 0.0
    %1737 = vmatpush1.msra.mxu0 0.0
    %1738 = vmatprep.subr.mxu0 0.0
    %1739 = vmatpush1.msra.mxu0 0.0
    %1740 = vmatprep.subr.mxu0 0.0
    %1741 = vmatpush1.msra.mxu0 0.0
    %1742 = vmatprep.subr.mxu0 0.0
    %1743 = vmatpush1.msra.mxu0 0.0
    %1744 = vmatprep.subr.mxu0 0.0
    %1745 = vmatpush1.msra.mxu0 0.0
    %1746 = vmatprep.mubr.f32.mxu0 0.0
    %1747 = vmatmul.mubr.f32.gmra.mrb[0].mxu0 %v1676
    %v1748 = vpop.f32.mrb[0].mxu0
    %v1749 = vadd.f32 %v1672, %v1748
    %v1750 = vpop.f32.mrb[0].mxu0
    %1751 = vdwg.mxu0
    %v1752 = vmax.f32 %v1749, 0.0
    %vm1753 = vcmask 9216
    %1754 = vst.msk [vmem:[#allocation8] sm:$0x3] %vm1753, %v1752
    // Predicated region
    $region50: #{lenet_forward.1} parent=1 // pred_check
      _
    $region51: #{lenet_forward.1} parent=1 // pred_check_branch
      %1756 = sbr.rel (0) target = $region53
    $region52: #{lenet_forward.1} parent=1 // pred_region
      %s1758 = ssub.s32 32, 32
      %1759 = vsyncadd [#allocation7], %s1758
      %s1761 = sshll.u32 [#allocation8], 4
      %s1762 = int_to_ptr.vmem [resolvable:$true] %s1761
      %1764 = dma.vmem_to_hbm [thread:$0]  %s1762, 32, %s11, [#allocation7]
    $region53: #{lenet_forward.1} parent=1 // pred_fallthru
      _
    // Predicated region
    $region54: #{lenet_forward.1} parent=1 // pred_check
      _
    $region55: #{lenet_forward.1} parent=1 // pred_check_branch
      %1766 = sbr.rel (0) target = $region57
    $region56: #{lenet_forward.1} parent=1 // pred_region
      %1767 = dma.done [#allocation7], 32
    $region57: #{lenet_forward.1} parent=1 // pred_fallthru
      _
    %1768 = vsyncpa [#allocation6], 1
    %1769 = vsyncpa [#allocation7], 1

</llo_original>
